<compile_context>
chip_gen: v7x
topology: tpu7x:2x2x1
jax: 0.10.0
libtpu: 0.0.40
codegen_flags: <defaults>
</compile_context>

<pallas_src>
import functools
import math

import jax
import jax.numpy as jnp
from jax import lax
from jax.experimental import pallas as pl
from jax.experimental.pallas import tpu as pltpu


def _ceil_to(a: int, m: int) -> int:
    return ((a + m - 1) // m) * m


# ---------------------------------------------------------------------------
# Kernel: one time-chunk of T steps per grid iteration
# ---------------------------------------------------------------------------
def _decoder_chunk_kernel(
    x_ref,        # [T*Bp, Din]  chunk of inputs (time-major, batch inner)
    z_ref,        # [Bp, d_z]
    w_init_ref,   # [d_z, 2H]    (pre-transposed)
    b_init_ref,   # [1, 2H]
    w_ih_ref,     # [Din, 4H]    (pre-transposed)
    w_hh_ref,     # [H, 4H]      (pre-transposed)
    b_lstm_ref,   # [1, 4H]      (b_ih + b_hh)
    w_head_ref,   # [H, P]       fused (q_head | mixtures), zero-padded to P lanes
    b_head_ref,   # [1, P]
    head_ref,     # [T*Bp, P]    out: raw fused head output for this chunk
    h_n_ref,      # [Bp, H]      out: final hidden state (used as resident carry)
    c_n_ref,      # [Bp, H]      out: final cell state   (used as resident carry)
    gx_sc,        # VMEM [T*Bp, 4H]  per-chunk input projection
    h_all_sc,     # VMEM [T*Bp, H]   per-step hidden states of this chunk
    *,
    T: int,
    B: int,
    H: int,
    S: int,
    needs_mask: bool,
):
    ci = pl.program_id(0)

    # state is None path: (h0, c0) = split(tanh(init_state(z)), H, dim=1)
    @pl.when(ci == 0)
    def _():
        init = jnp.tanh(
            jnp.dot(z_ref[...], w_init_ref[...],
                    preferred_element_type=jnp.float32)
            + b_init_ref[...]
        )
        h_n_ref[...] = init[:, :H]
        c_n_ref[...] = init[:, H:]

    # (1) Input projection for the whole chunk, off the serialized path:
    #     one [T*B, Din] x [Din, 4H] matmul (includes both LSTM biases).
    gx_sc[...] = (
        jnp.dot(x_ref[...], w_ih_ref[...], preferred_element_type=jnp.float32)
        + b_lstm_ref[...]
    )

    # (2) Sequential LSTM recurrence over T steps.  Only h @ W_hh remains on
    #     the critical path.  PyTorch gate order: i, f, g, o.
    def step(i, carry):
        h, c = carry
        off = pl.multiple_of(i * B, B)          # B is a multiple of 8
        gates = gx_sc[pl.ds(off, B), :] + jnp.dot(
            h, w_hh_ref[...], preferred_element_type=jnp.float32)
        i_g = jax.nn.sigmoid(gates[:, 0 * H:1 * H])
        f_g = jax.nn.sigmoid(gates[:, 1 * H:2 * H])
        g_g = jnp.tanh(gates[:, 2 * H:3 * H])
        o_g = jax.nn.sigmoid(gates[:, 3 * H:4 * H])
        c_new = f_g * c + i_g * g_g
        h_new = o_g * jnp.tanh(c_new)
        if needs_mask:  # static flag: freeze carry on padded time steps
            valid = (ci * T + i) < S
            h_new = jnp.where(valid, h_new, h)
            c_new = jnp.where(valid, c_new, c)
        h_all_sc[pl.ds(off, B), :] = h_new
        return h_new, c_new

    h_fin, c_fin = lax.fori_loop(
        0, T, step, (h_n_ref[...], c_n_ref[...]), unroll=True)
    h_n_ref[...] = h_fin
    c_n_ref[...] = c_fin

    # (3) Fused q + mixture head, once per chunk, lane-dense output (P=128).
    #     log_softmax / exp / tanh are applied in the wrapper (fused XLA pass).
    head_ref[...] = (
        jnp.dot(h_all_sc[...], w_head_ref[...],
                preferred_element_type=jnp.float32)
        + b_head_ref[...]
    )


# ---------------------------------------------------------------------------
# Wrapper
# ---------------------------------------------------------------------------
def decoder_rnn_forward(x, z, params, *, hidden_size, n_dist, chunk=16):
    """Pallas implementation of DecoderRNN.forward with state=None."""
    S, B, Din = x.shape
    d_z = z.shape[1]
    H, M = hidden_size, n_dist
    f32 = jnp.float32

    # chunk / padding bookkeeping
    T = max(1, min(chunk, S))
    S_p = _ceil_to(S, T)
    B_p = _ceil_to(B, 8)            # sublane alignment
    needs_mask = (S_p != S)
    num_chunks = S_p // T
    TB = T * B_p

    Q = 3 + 6 * M                   # real fused-head width
    P = _ceil_to(Q, 128)            # lane-dense padded width

    # glue: pre-transpose / fuse / pad weights so the kernel does plain
    # [rows,K]x[K,N] matmuls with lane-dense outputs.
    w_init_t = params["w_init"].T.astype(f32)                    # [d_z, 2H]
    b_init = params["b_init"].reshape(1, 2 * H).astype(f32)
    w_ih_t = params["w_ih"].T.astype(f32)                        # [Din, 4H]
    w_hh_t = params["w_hh"].T.astype(f32)                        # [H, 4H]
    b_lstm = (params["b_ih"] + params["b_hh"]).reshape(1, 4 * H).astype(f32)

    w_head = jnp.zeros((H, P), f32)
    w_head = w_head.at[:, 0:3].set(params["w_q"].T.astype(f32))
    w_head = w_head.at[:, 3:Q].set(params["w_m"].T.astype(f32))
    b_head = jnp.zeros((1, P), f32)
    b_head = b_head.at[0, 0:3].set(params["b_q"].astype(f32))
    b_head = b_head.at[0, 3:Q].set(params["b_m"].astype(f32))

    # pad activations (zero-padded batch rows / time steps are discarded;
    # padded time steps are masked in-kernel so the final state is exact).
    x_p = jnp.zeros((S_p, B_p, Din), f32).at[:S, :B, :].set(x.astype(f32))
    z_p = jnp.zeros((B_p, d_z), f32).at[:B, :].set(z.astype(f32))
    x_flat = x_p.reshape(S_p * B_p, Din)

    kernel = functools.partial(
        _decoder_chunk_kernel, T=T, B=B_p, H=H, S=S, needs_mask=needs_mask)

    def const(shape):
        return pl.BlockSpec(shape, lambda ci: (0, 0))

    grid_spec = pltpu.PrefetchScalarGridSpec(
        num_scalar_prefetch=0,
        grid=(num_chunks,),
        in_specs=[
            pl.BlockSpec((TB, Din), lambda ci: (ci, 0)),   # x chunk
            const((B_p, d_z)),                             # z
            const((d_z, 2 * H)),                           # w_init^T
            const((1, 2 * H)),                             # b_init
            const((Din, 4 * H)),                           # w_ih^T
            const((H, 4 * H)),                             # w_hh^T
            const((1, 4 * H)),                             # b_lstm
            const((H, P)),                                 # fused head weight
            const((1, P)),                                 # fused head bias
        ],
        out_specs=[
            pl.BlockSpec((TB, P), lambda ci: (ci, 0)),     # fused head (lane-dense)
            const((B_p, H)),                               # h_n (resident carry)
            const((B_p, H)),                               # c_n (resident carry)
        ],
        scratch_shapes=[
            pltpu.VMEM((TB, 4 * H), jnp.float32),          # gates_x for the chunk
            pltpu.VMEM((TB, H), jnp.float32),              # per-step hidden states
        ],
    )

    head_flat, h_n_p, c_n_p = pl.pallas_call(
        kernel,
        grid_spec=grid_spec,
        out_shape=(
            jax.ShapeDtypeStruct((S_p * B_p, P), jnp.float32),
            jax.ShapeDtypeStruct((B_p, H), jnp.float32),
            jax.ShapeDtypeStruct((B_p, H), jnp.float32),
        ),
        compiler_params=pltpu.CompilerParams(
            dimension_semantics=("arbitrary",),            # sequential recurrence
            vmem_limit_bytes=32 * 1024 * 1024,
        ),
    )(x_flat, z_p, w_init_t, b_init, w_ih_t, w_hh_t, b_lstm, w_head, b_head)

    # glue: un-pad, split the fused head, apply transforms (one fused XLA pass)
    head = head_flat.reshape(S_p, B_p, P)[:S, :B, :Q]
    q_logits = jax.nn.log_softmax(head[..., :3], axis=-1)
    mix = head[..., 3:Q]
    pi_logits = mix[..., 0 * M:1 * M]
    mu_x      = mix[..., 1 * M:2 * M]
    mu_y      = mix[..., 2 * M:3 * M]
    sigma_x   = jnp.exp(mix[..., 3 * M:4 * M])
    sigma_y   = jnp.exp(mix[..., 4 * M:5 * M])
    rho_xy    = jnp.tanh(mix[..., 5 * M:6 * M])
    dist = (pi_logits, mu_x, mu_y, sigma_x, sigma_y, rho_xy)

    h_n = h_n_p[:B][None]     # [1, B, H]
    c_n = c_n_p[:B][None]
    return dist, q_logits, (h_n, c_n)


# ---------------------------------------------------------------------------
# Pure-JAX reference (mirrors the PyTorch module semantics)
# ---------------------------------------------------------------------------
def reference_forward(x, z, p, *, hidden_size, n_dist):
    H, M = hidden_size, n_dist
    init = jnp.tanh(z @ p["w_init"].T + p["b_init"])
    h0, c0 = init[:, :H], init[:, H:]

    def step(carry, x_t):
        h, c = carry
        gates = x_t @ p["w_ih"].T + p["b_ih"] + h @ p["w_hh"].T + p["b_hh"]
        i = jax.nn.sigmoid(gates[:, 0 * H:1 * H])
        f = jax.nn.sigmoid(gates[:, 1 * H:2 * H])
        g = jnp.tanh(gates[:, 2 * H:3 * H])
        o = jax.nn.sigmoid(gates[:, 3 * H:4 * H])
        c = f * c + i * g
        h = o * jnp.tanh(c)
        return (h, c), h

    (h_n, c_n), outs = jax.lax.scan(step, (h0, c0), x)
    q_logits = jax.nn.log_softmax(outs @ p["w_q"].T + p["b_q"], axis=-1)
    mix = outs @ p["w_m"].T + p["b_m"]
    dist = (
        mix[..., 0 * M:1 * M],
        mix[..., 1 * M:2 * M],
        mix[..., 2 * M:3 * M],
        jnp.exp(mix[..., 3 * M:4 * M]),
        jnp.exp(mix[..., 4 * M:5 * M]),
        jnp.tanh(mix[..., 5 * M:6 * M]),
    )
    return dist, q_logits, (h_n[None], c_n[None])


# ---------------------------------------------------------------------------
# Deterministic parameter init (PyTorch-style uniform(-1/sqrt(H), 1/sqrt(H)))
# ---------------------------------------------------------------------------
def init_params(key, d_z, hidden_size, n_dist):
    H, M = hidden_size, n_dist
    d_in = d_z + 5
    ks = jax.random.split(key, 10)
    u = lambda k, shape, bound: jax.random.uniform(
        k, shape, jnp.float32, -bound, bound)
    kH = 1.0 / math.sqrt(H)
    kZ = 1.0 / math.sqrt(d_z)
    return {
        "w_ih":   u(ks[0], (4 * H, d_in), kH),
        "w_hh":   u(ks[1], (4 * H, H), kH),
        "b_ih":   u(ks[2], (4 * H,), kH),
        "b_hh":   u(ks[3], (4 * H,), kH),
        "w_init": u(ks[4], (2 * H, d_z), kZ),
        "b_init": u(ks[5], (2 * H,), kZ),
        "w_m":    u(ks[6], (6 * M, H), kH),
        "b_m":    u(ks[7], (6 * M,), kH),
        "w_q":    u(ks[8], (3, H), kH),
        "b_q":    u(ks[9], (3,), kH),
    }


def _check(x, z, params, *, hidden_size, n_dist, chunk):
    dist, q_logits, (h_n, c_n) = decoder_rnn_forward(
        x, z, params, hidden_size=hidden_size, n_dist=n_dist, chunk=chunk)
    jax.block_until_ready((dist, q_logits, h_n, c_n))
    dist_r, q_r, (h_r, c_r) = reference_forward(
        x, z, params, hidden_size=hidden_size, n_dist=n_dist)
    for a, b in list(zip(dist, dist_r)) + [(q_logits, q_r), (h_n, h_r), (c_n, c_r)]:
        assert a.shape == b.shape, f"shape mismatch {a.shape} vs {b.shape}"
        assert jnp.allclose(a, b, atol=2e-4, rtol=2e-4), "mismatch vs reference"


if __name__ == "__main__":
    d_z = 8
    dec_hidden_size = 32
    n_distributions = 4

    key = jax.random.PRNGKey(0)
    k_x, k_z, k_p = jax.random.split(key, 3)
    params = init_params(k_p, d_z, dec_hidden_size, n_distributions)

    # Primary config: seq_len=8, batch=2 (single chunk, padded batch).
    seq_len, batch = 8, 2
    x = jax.random.normal(k_x, (seq_len, batch, d_z + 5), jnp.float32)
    z = jax.random.normal(k_z, (batch, d_z), jnp.float32)
    _check(x, z, params, hidden_size=dec_hidden_size, n_dist=n_distributions,
           chunk=16)

    # Secondary config: exercises multi-chunk grid + padded-time masking.
    seq_len2, batch2 = 11, 3
    k_x2, k_z2 = jax.random.split(jax.random.PRNGKey(1))
    x2 = jax.random.normal(k_x2, (seq_len2, batch2, d_z + 5), jnp.float32)
    z2 = jax.random.normal(k_z2, (batch2, d_z), jnp.float32)
    _check(x2, z2, params, hidden_size=dec_hidden_size, n_dist=n_distributions,
           chunk=4)

    print("KERNEL_OK")
</pallas_src>

<mosaic_0001>
module attributes {stable_mosaic.version = 11 : i64} {
  func.func @_decoder_chunk_kernel(%arg0: i32, %arg1: memref<64x13xf32, #tpu.memory_space<vmem>>, %arg2: memref<8x8xf32, #tpu.memory_space<vmem>>, %arg3: memref<8x64xf32, #tpu.memory_space<vmem>>, %arg4: memref<1x64xf32, #tpu.memory_space<vmem>>, %arg5: memref<13x128xf32, #tpu.memory_space<vmem>>, %arg6: memref<32x128xf32, #tpu.memory_space<vmem>>, %arg7: memref<1x128xf32, #tpu.memory_space<vmem>>, %arg8: memref<32x128xf32, #tpu.memory_space<vmem>>, %arg9: memref<1x128xf32, #tpu.memory_space<vmem>>, %arg10: memref<64x128xf32, #tpu.memory_space<vmem>>, %arg11: memref<8x32xf32, #tpu.memory_space<vmem>>, %arg12: memref<8x32xf32, #tpu.memory_space<vmem>>, %arg13: memref<64x128xf32, #tpu.memory_space<vmem>>, %arg14: memref<64x32xf32, #tpu.memory_space<vmem>>) attributes {dimension_semantics = [#tpu.dimension_semantics<arbitrary>], iteration_bounds = array<i64: 1>, scalar_prefetch = 0 : i64, scratch_operands = 2 : i64, tpu.core_type = #tpu.core_type<tc>, window_params = [{transform_indices = @transform_0, window_bounds = array<i64: 64, 13>}, {pipeline_mode = #tpu.pipeline_mode<synchronous>, transform_indices = @transform_1, window_bounds = array<i64: 8, 8>}, {pipeline_mode = #tpu.pipeline_mode<synchronous>, transform_indices = @transform_2, window_bounds = array<i64: 8, 64>}, {pipeline_mode = #tpu.pipeline_mode<synchronous>, transform_indices = @transform_3, window_bounds = array<i64: 1, 64>}, {pipeline_mode = #tpu.pipeline_mode<synchronous>, transform_indices = @transform_4, window_bounds = array<i64: 13, 128>}, {pipeline_mode = #tpu.pipeline_mode<synchronous>, transform_indices = @transform_5, window_bounds = array<i64: 32, 128>}, {pipeline_mode = #tpu.pipeline_mode<synchronous>, transform_indices = @transform_6, window_bounds = array<i64: 1, 128>}, {pipeline_mode = #tpu.pipeline_mode<synchronous>, transform_indices = @transform_7, window_bounds = array<i64: 32, 128>}, {pipeline_mode = #tpu.pipeline_mode<synchronous>, transform_indices = @transform_8, window_bounds = array<i64: 1, 128>}, {transform_indices = @transform_9, window_bounds = array<i64: 64, 128>}, {pipeline_mode = #tpu.pipeline_mode<synchronous>, transform_indices = @transform_10, window_bounds = array<i64: 8, 32>}, {pipeline_mode = #tpu.pipeline_mode<synchronous>, transform_indices = @transform_11, window_bounds = array<i64: 8, 32>}]} {
    %c0_i32 = arith.constant 0 : i32
    %0 = arith.cmpi eq, %arg0, %c0_i32 : i32
    %1 = arith.extui %0 : i1 to i32
    %c0_i32_0 = arith.constant 0 : i32
    %2 = arith.cmpi ne, %1, %c0_i32_0 : i32
    scf.if %2 {
      %c0_98 = arith.constant 0 : index
      %c0_99 = arith.constant 0 : index
      %293 = vector.load %arg2[%c0_98, %c0_99] : memref<8x8xf32, #tpu.memory_space<vmem>>, vector<8x8xf32>
      %c0_100 = arith.constant 0 : index
      %c0_101 = arith.constant 0 : index
      %294 = vector.load %arg3[%c0_100, %c0_101] : memref<8x64xf32, #tpu.memory_space<vmem>>, vector<8x64xf32>
      %cst_102 = arith.constant dense<0.000000e+00> : vector<8x64xf32>
      %295 = tpu.matmul %293, %294, %cst_102 {dimension_numbers = #tpu.dot_dimension_numbers<[1], [0], [0], [1], [0, 0, 1, 1], [], []>} : vector<8x8xf32>, vector<8x64xf32>, vector<8x64xf32> -> vector<8x64xf32>
      %c0_103 = arith.constant 0 : index
      %c0_104 = arith.constant 0 : index
      %296 = vector.load %arg4[%c0_103, %c0_104] : memref<1x64xf32, #tpu.memory_space<vmem>>, vector<1x64xf32>
      %297 = vector.broadcast %296 : vector<1x64xf32> to vector<8x64xf32>
      %298 = arith.addf %295, %297 : vector<8x64xf32>
      %299 = math.tanh %298 : vector<8x64xf32>
      %300 = vector.extract_strided_slice %299 {offsets = [0, 0], sizes = [8, 32], strides = [1, 1]} : vector<8x64xf32> to vector<8x32xf32>
      %c0_105 = arith.constant 0 : index
      %c0_106 = arith.constant 0 : index
      %301 = vector.load %arg11[%c0_105, %c0_106] : memref<8x32xf32, #tpu.memory_space<vmem>>, vector<8x32xf32>
      tpu.vector_store %arg11[%c0_105, %c0_106], %300 {strides = array<i32>} : memref<8x32xf32, #tpu.memory_space<vmem>>, vector<8x32xf32>,
      %302 = vector.extract_strided_slice %299 {offsets = [0, 32], sizes = [8, 32], strides = [1, 1]} : vector<8x64xf32> to vector<8x32xf32>
      %c0_107 = arith.constant 0 : index
      %c0_108 = arith.constant 0 : index
      %303 = vector.load %arg12[%c0_107, %c0_108] : memref<8x32xf32, #tpu.memory_space<vmem>>, vector<8x32xf32>
      tpu.vector_store %arg12[%c0_107, %c0_108], %302 {strides = array<i32>} : memref<8x32xf32, #tpu.memory_space<vmem>>, vector<8x32xf32>,
    } else {
    }
    %c0 = arith.constant 0 : index
    %c0_1 = arith.constant 0 : index
    %3 = vector.load %arg1[%c0, %c0_1] : memref<64x13xf32, #tpu.memory_space<vmem>>, vector<64x13xf32>
    %c0_2 = arith.constant 0 : index
    %c0_3 = arith.constant 0 : index
    %4 = vector.load %arg5[%c0_2, %c0_3] : memref<13x128xf32, #tpu.memory_space<vmem>>, vector<13x128xf32>
    %cst = arith.constant dense<0.000000e+00> : vector<64x128xf32>
    %5 = tpu.matmul %3, %4, %cst {dimension_numbers = #tpu.dot_dimension_numbers<[1], [0], [0], [1], [0, 0, 1, 1], [], []>} : vector<64x13xf32>, vector<13x128xf32>, vector<64x128xf32> -> vector<64x128xf32>
    %c0_4 = arith.constant 0 : index
    %c0_5 = arith.constant 0 : index
    %6 = vector.load %arg7[%c0_4, %c0_5] : memref<1x128xf32, #tpu.memory_space<vmem>>, vector<1x128xf32>
    %7 = vector.broadcast %6 : vector<1x128xf32> to vector<64x128xf32>
    %8 = arith.addf %5, %7 : vector<64x128xf32>
    %c0_6 = arith.constant 0 : index
    %c0_7 = arith.constant 0 : index
    %9 = vector.load %arg13[%c0_6, %c0_7] : memref<64x128xf32, #tpu.memory_space<vmem>>, vector<64x128xf32>
    tpu.vector_store %arg13[%c0_6, %c0_7], %8 {strides = array<i32>} : memref<64x128xf32, #tpu.memory_space<vmem>>, vector<64x128xf32>,
    %c0_8 = arith.constant 0 : index
    %c0_9 = arith.constant 0 : index
    %10 = vector.load %arg11[%c0_8, %c0_9] : memref<8x32xf32, #tpu.memory_space<vmem>>, vector<8x32xf32>
    %c0_10 = arith.constant 0 : index
    %c0_11 = arith.constant 0 : index
    %11 = vector.load %arg12[%c0_10, %c0_11] : memref<8x32xf32, #tpu.memory_space<vmem>>, vector<8x32xf32>
    %c0_i32_12 = arith.constant 0 : i32
    %c8_i32 = arith.constant 8 : i32
    %12 = arith.muli %c0_i32_12, %c8_i32 : i32
    %13 = tpu.assume_multiple %12, 8 : i32
    %14 = arith.index_cast %13 : i32 to index
    %c0_13 = arith.constant 0 : index
    %15 = vector.load %arg13[%14, %c0_13] : memref<64x128xf32, #tpu.memory_space<vmem>>, vector<8x128xf32>
    %c0_14 = arith.constant 0 : index
    %c0_15 = arith.constant 0 : index
    %16 = vector.load %arg6[%c0_14, %c0_15] : memref<32x128xf32, #tpu.memory_space<vmem>>, vector<32x128xf32>
    %cst_16 = arith.constant dense<0.000000e+00> : vector<8x128xf32>
    %17 = tpu.matmul %10, %16, %cst_16 {dimension_numbers = #tpu.dot_dimension_numbers<[1], [0], [0], [1], [0, 0, 1, 1], [], []>} : vector<8x32xf32>, vector<32x128xf32>, vector<8x128xf32> -> vector<8x128xf32>
    %18 = arith.addf %15, %17 : vector<8x128xf32>
    %19 = vector.extract_strided_slice %18 {offsets = [0, 0], sizes = [8, 32], strides = [1, 1]} : vector<8x128xf32> to vector<8x32xf32>
    %20 = arith.negf %19 : vector<8x32xf32>
    %21 = math.exp %20 : vector<8x32xf32>
    %cst_17 = arith.constant 1.000000e+00 : f32
    %22 = vector.broadcast %cst_17 : f32 to vector<8x32xf32>
    %23 = arith.addf %22, %21 : vector<8x32xf32>
    %24 = arith.divf %22, %23 : vector<8x32xf32>
    %25 = vector.extract_strided_slice %18 {offsets = [0, 32], sizes = [8, 32], strides = [1, 1]} : vector<8x128xf32> to vector<8x32xf32>
    %26 = arith.negf %25 : vector<8x32xf32>
    %27 = math.exp %26 : vector<8x32xf32>
    %cst_18 = arith.constant 1.000000e+00 : f32
    %28 = vector.broadcast %cst_18 : f32 to vector<8x32xf32>
    %29 = arith.addf %28, %27 : vector<8x32xf32>
    %30 = arith.divf %28, %29 : vector<8x32xf32>
    %31 = vector.extract_strided_slice %18 {offsets = [0, 64], sizes = [8, 32], strides = [1, 1]} : vector<8x128xf32> to vector<8x32xf32>
    %32 = math.tanh %31 : vector<8x32xf32>
    %33 = vector.extract_strided_slice %18 {offsets = [0, 96], sizes = [8, 32], strides = [1, 1]} : vector<8x128xf32> to vector<8x32xf32>
    %34 = arith.negf %33 : vector<8x32xf32>
    %35 = math.exp %34 : vector<8x32xf32>
    %cst_19 = arith.constant 1.000000e+00 : f32
    %36 = vector.broadcast %cst_19 : f32 to vector<8x32xf32>
    %37 = arith.addf %36, %35 : vector<8x32xf32>
    %38 = arith.divf %36, %37 : vector<8x32xf32>
    %39 = arith.mulf %30, %11 : vector<8x32xf32>
    %40 = arith.mulf %24, %32 : vector<8x32xf32>
    %41 = arith.addf %39, %40 : vector<8x32xf32>
    %42 = math.tanh %41 : vector<8x32xf32>
    %43 = arith.mulf %38, %42 : vector<8x32xf32>
    %44 = arith.index_cast %13 : i32 to index
    %c0_20 = arith.constant 0 : index
    %45 = vector.load %arg14[%44, %c0_20] : memref<64x32xf32, #tpu.memory_space<vmem>>, vector<8x32xf32>
    tpu.vector_store %arg14[%44, %c0_20], %43 {strides = array<i32>} : memref<64x32xf32, #tpu.memory_space<vmem>>, vector<8x32xf32>,
    %c1_i32 = arith.constant 1 : i32
    %c8_i32_21 = arith.constant 8 : i32
    %46 = arith.muli %c1_i32, %c8_i32_21 : i32
    %47 = tpu.assume_multiple %46, 8 : i32
    %48 = arith.index_cast %47 : i32 to index
    %c0_22 = arith.constant 0 : index
    %49 = vector.load %arg13[%48, %c0_22] : memref<64x128xf32, #tpu.memory_space<vmem>>, vector<8x128xf32>
    %c0_23 = arith.constant 0 : index
    %c0_24 = arith.constant 0 : index
    %50 = vector.load %arg6[%c0_23, %c0_24] : memref<32x128xf32, #tpu.memory_space<vmem>>, vector<32x128xf32>
    %cst_25 = arith.constant dense<0.000000e+00> : vector<8x128xf32>
    %51 = tpu.matmul %43, %50, %cst_25 {dimension_numbers = #tpu.dot_dimension_numbers<[1], [0], [0], [1], [0, 0, 1, 1], [], []>} : vector<8x32xf32>, vector<32x128xf32>, vector<8x128xf32> -> vector<8x128xf32>
    %52 = arith.addf %49, %51 : vector<8x128xf32>
    %53 = vector.extract_strided_slice %52 {offsets = [0, 0], sizes = [8, 32], strides = [1, 1]} : vector<8x128xf32> to vector<8x32xf32>
    %54 = arith.negf %53 : vector<8x32xf32>
    %55 = math.exp %54 : vector<8x32xf32>
    %cst_26 = arith.constant 1.000000e+00 : f32
    %56 = vector.broadcast %cst_26 : f32 to vector<8x32xf32>
    %57 = arith.addf %56, %55 : vector<8x32xf32>
    %58 = arith.divf %56, %57 : vector<8x32xf32>
    %59 = vector.extract_strided_slice %52 {offsets = [0, 32], sizes = [8, 32], strides = [1, 1]} : vector<8x128xf32> to vector<8x32xf32>
    %60 = arith.negf %59 : vector<8x32xf32>
    %61 = math.exp %60 : vector<8x32xf32>
    %cst_27 = arith.constant 1.000000e+00 : f32
    %62 = vector.broadcast %cst_27 : f32 to vector<8x32xf32>
    %63 = arith.addf %62, %61 : vector<8x32xf32>
    %64 = arith.divf %62, %63 : vector<8x32xf32>
    %65 = vector.extract_strided_slice %52 {offsets = [0, 64], sizes = [8, 32], strides = [1, 1]} : vector<8x128xf32> to vector<8x32xf32>
    %66 = math.tanh %65 : vector<8x32xf32>
    %67 = vector.extract_strided_slice %52 {offsets = [0, 96], sizes = [8, 32], strides = [1, 1]} : vector<8x128xf32> to vector<8x32xf32>
    %68 = arith.negf %67 : vector<8x32xf32>
    %69 = math.exp %68 : vector<8x32xf32>
    %cst_28 = arith.constant 1.000000e+00 : f32
    %70 = vector.broadcast %cst_28 : f32 to vector<8x32xf32>
    %71 = arith.addf %70, %69 : vector<8x32xf32>
    %72 = arith.divf %70, %71 : vector<8x32xf32>
    %73 = arith.mulf %64, %41 : vector<8x32xf32>
    %74 = arith.mulf %58, %66 : vector<8x32xf32>
    %75 = arith.addf %73, %74 : vector<8x32xf32>
    %76 = math.tanh %75 : vector<8x32xf32>
    %77 = arith.mulf %72, %76 : vector<8x32xf32>
    %78 = arith.index_cast %47 : i32 to index
    %c0_29 = arith.constant 0 : index
    %79 = vector.load %arg14[%78, %c0_29] : memref<64x32xf32, #tpu.memory_space<vmem>>, vector<8x32xf32>
    tpu.vector_store %arg14[%78, %c0_29], %77 {strides = array<i32>} : memref<64x32xf32, #tpu.memory_space<vmem>>, vector<8x32xf32>,
    %c2_i32 = arith.constant 2 : i32
    %c8_i32_30 = arith.constant 8 : i32
    %80 = arith.muli %c2_i32, %c8_i32_30 : i32
    %81 = tpu.assume_multiple %80, 8 : i32
    %82 = arith.index_cast %81 : i32 to index
    %c0_31 = arith.constant 0 : index
    %83 = vector.load %arg13[%82, %c0_31] : memref<64x128xf32, #tpu.memory_space<vmem>>, vector<8x128xf32>
    %c0_32 = arith.constant 0 : index
    %c0_33 = arith.constant 0 : index
    %84 = vector.load %arg6[%c0_32, %c0_33] : memref<32x128xf32, #tpu.memory_space<vmem>>, vector<32x128xf32>
    %cst_34 = arith.constant dense<0.000000e+00> : vector<8x128xf32>
    %85 = tpu.matmul %77, %84, %cst_34 {dimension_numbers = #tpu.dot_dimension_numbers<[1], [0], [0], [1], [0, 0, 1, 1], [], []>} : vector<8x32xf32>, vector<32x128xf32>, vector<8x128xf32> -> vector<8x128xf32>
    %86 = arith.addf %83, %85 : vector<8x128xf32>
    %87 = vector.extract_strided_slice %86 {offsets = [0, 0], sizes = [8, 32], strides = [1, 1]} : vector<8x128xf32> to vector<8x32xf32>
    %88 = arith.negf %87 : vector<8x32xf32>
    %89 = math.exp %88 : vector<8x32xf32>
    %cst_35 = arith.constant 1.000000e+00 : f32
    %90 = vector.broadcast %cst_35 : f32 to vector<8x32xf32>
    %91 = arith.addf %90, %89 : vector<8x32xf32>
    %92 = arith.divf %90, %91 : vector<8x32xf32>
    %93 = vector.extract_strided_slice %86 {offsets = [0, 32], sizes = [8, 32], strides = [1, 1]} : vector<8x128xf32> to vector<8x32xf32>
    %94 = arith.negf %93 : vector<8x32xf32>
    %95 = math.exp %94 : vector<8x32xf32>
    %cst_36 = arith.constant 1.000000e+00 : f32
    %96 = vector.broadcast %cst_36 : f32 to vector<8x32xf32>
    %97 = arith.addf %96, %95 : vector<8x32xf32>
    %98 = arith.divf %96, %97 : vector<8x32xf32>
    %99 = vector.extract_strided_slice %86 {offsets = [0, 64], sizes = [8, 32], strides = [1, 1]} : vector<8x128xf32> to vector<8x32xf32>
    %100 = math.tanh %99 : vector<8x32xf32>
    %101 = vector.extract_strided_slice %86 {offsets = [0, 96], sizes = [8, 32], strides = [1, 1]} : vector<8x128xf32> to vector<8x32xf32>
    %102 = arith.negf %101 : vector<8x32xf32>
    %103 = math.exp %102 : vector<8x32xf32>
    %cst_37 = arith.constant 1.000000e+00 : f32
    %104 = vector.broadcast %cst_37 : f32 to vector<8x32xf32>
    %105 = arith.addf %104, %103 : vector<8x32xf32>
    %106 = arith.divf %104, %105 : vector<8x32xf32>
    %107 = arith.mulf %98, %75 : vector<8x32xf32>
    %108 = arith.mulf %92, %100 : vector<8x32xf32>
    %109 = arith.addf %107, %108 : vector<8x32xf32>
    %110 = math.tanh %109 : vector<8x32xf32>
    %111 = arith.mulf %106, %110 : vector<8x32xf32>
    %112 = arith.index_cast %81 : i32 to index
    %c0_38 = arith.constant 0 : index
    %113 = vector.load %arg14[%112, %c0_38] : memref<64x32xf32, #tpu.memory_space<vmem>>, vector<8x32xf32>
    tpu.vector_store %arg14[%112, %c0_38], %111 {strides = array<i32>} : memref<64x32xf32, #tpu.memory_space<vmem>>, vector<8x32xf32>,
    %c3_i32 = arith.constant 3 : i32
    %c8_i32_39 = arith.constant 8 : i32
    %114 = arith.muli %c3_i32, %c8_i32_39 : i32
    %115 = tpu.assume_multiple %114, 8 : i32
    %116 = arith.index_cast %115 : i32 to index
    %c0_40 = arith.constant 0 : index
    %117 = vector.load %arg13[%116, %c0_40] : memref<64x128xf32, #tpu.memory_space<vmem>>, vector<8x128xf32>
    %c0_41 = arith.constant 0 : index
    %c0_42 = arith.constant 0 : index
    %118 = vector.load %arg6[%c0_41, %c0_42] : memref<32x128xf32, #tpu.memory_space<vmem>>, vector<32x128xf32>
    %cst_43 = arith.constant dense<0.000000e+00> : vector<8x128xf32>
    %119 = tpu.matmul %111, %118, %cst_43 {dimension_numbers = #tpu.dot_dimension_numbers<[1], [0], [0], [1], [0, 0, 1, 1], [], []>} : vector<8x32xf32>, vector<32x128xf32>, vector<8x128xf32> -> vector<8x128xf32>
    %120 = arith.addf %117, %119 : vector<8x128xf32>
    %121 = vector.extract_strided_slice %120 {offsets = [0, 0], sizes = [8, 32], strides = [1, 1]} : vector<8x128xf32> to vector<8x32xf32>
    %122 = arith.negf %121 : vector<8x32xf32>
    %123 = math.exp %122 : vector<8x32xf32>
    %cst_44 = arith.constant 1.000000e+00 : f32
    %124 = vector.broadcast %cst_44 : f32 to vector<8x32xf32>
    %125 = arith.addf %124, %123 : vector<8x32xf32>
    %126 = arith.divf %124, %125 : vector<8x32xf32>
    %127 = vector.extract_strided_slice %120 {offsets = [0, 32], sizes = [8, 32], strides = [1, 1]} : vector<8x128xf32> to vector<8x32xf32>
    %128 = arith.negf %127 : vector<8x32xf32>
    %129 = math.exp %128 : vector<8x32xf32>
    %cst_45 = arith.constant 1.000000e+00 : f32
    %130 = vector.broadcast %cst_45 : f32 to vector<8x32xf32>
    %131 = arith.addf %130, %129 : vector<8x32xf32>
    %132 = arith.divf %130, %131 : vector<8x32xf32>
    %133 = vector.extract_strided_slice %120 {offsets = [0, 64], sizes = [8, 32], strides = [1, 1]} : vector<8x128xf32> to vector<8x32xf32>
    %134 = math.tanh %133 : vector<8x32xf32>
    %135 = vector.extract_strided_slice %120 {offsets = [0, 96], sizes = [8, 32], strides = [1, 1]} : vector<8x128xf32> to vector<8x32xf32>
    %136 = arith.negf %135 : vector<8x32xf32>
    %137 = math.exp %136 : vector<8x32xf32>
    %cst_46 = arith.constant 1.000000e+00 : f32
    %138 = vector.broadcast %cst_46 : f32 to vector<8x32xf32>
    %139 = arith.addf %138, %137 : vector<8x32xf32>
    %140 = arith.divf %138, %139 : vector<8x32xf32>
    %141 = arith.mulf %132, %109 : vector<8x32xf32>
    %142 = arith.mulf %126, %134 : vector<8x32xf32>
    %143 = arith.addf %141, %142 : vector<8x32xf32>
    %144 = math.tanh %143 : vector<8x32xf32>
    %145 = arith.mulf %140, %144 : vector<8x32xf32>
    %146 = arith.index_cast %115 : i32 to index
    %c0_47 = arith.constant 0 : index
    %147 = vector.load %arg14[%146, %c0_47] : memref<64x32xf32, #tpu.memory_space<vmem>>, vector<8x32xf32>
    tpu.vector_store %arg14[%146, %c0_47], %145 {strides = array<i32>} : memref<64x32xf32, #tpu.memory_space<vmem>>, vector<8x32xf32>,
    %c4_i32 = arith.constant 4 : i32
    %c8_i32_48 = arith.constant 8 : i32
    %148 = arith.muli %c4_i32, %c8_i32_48 : i32
    %149 = tpu.assume_multiple %148, 8 : i32
    %150 = arith.index_cast %149 : i32 to index
    %c0_49 = arith.constant 0 : index
    %151 = vector.load %arg13[%150, %c0_49] : memref<64x128xf32, #tpu.memory_space<vmem>>, vector<8x128xf32>
    %c0_50 = arith.constant 0 : index
    %c0_51 = arith.constant 0 : index
    %152 = vector.load %arg6[%c0_50, %c0_51] : memref<32x128xf32, #tpu.memory_space<vmem>>, vector<32x128xf32>
    %cst_52 = arith.constant dense<0.000000e+00> : vector<8x128xf32>
    %153 = tpu.matmul %145, %152, %cst_52 {dimension_numbers = #tpu.dot_dimension_numbers<[1], [0], [0], [1], [0, 0, 1, 1], [], []>} : vector<8x32xf32>, vector<32x128xf32>, vector<8x128xf32> -> vector<8x128xf32>
    %154 = arith.addf %151, %153 : vector<8x128xf32>
    %155 = vector.extract_strided_slice %154 {offsets = [0, 0], sizes = [8, 32], strides = [1, 1]} : vector<8x128xf32> to vector<8x32xf32>
    %156 = arith.negf %155 : vector<8x32xf32>
    %157 = math.exp %156 : vector<8x32xf32>
    %cst_53 = arith.constant 1.000000e+00 : f32
    %158 = vector.broadcast %cst_53 : f32 to vector<8x32xf32>
    %159 = arith.addf %158, %157 : vector<8x32xf32>
    %160 = arith.divf %158, %159 : vector<8x32xf32>
    %161 = vector.extract_strided_slice %154 {offsets = [0, 32], sizes = [8, 32], strides = [1, 1]} : vector<8x128xf32> to vector<8x32xf32>
    %162 = arith.negf %161 : vector<8x32xf32>
    %163 = math.exp %162 : vector<8x32xf32>
    %cst_54 = arith.constant 1.000000e+00 : f32
    %164 = vector.broadcast %cst_54 : f32 to vector<8x32xf32>
    %165 = arith.addf %164, %163 : vector<8x32xf32>
    %166 = arith.divf %164, %165 : vector<8x32xf32>
    %167 = vector.extract_strided_slice %154 {offsets = [0, 64], sizes = [8, 32], strides = [1, 1]} : vector<8x128xf32> to vector<8x32xf32>
    %168 = math.tanh %167 : vector<8x32xf32>
    %169 = vector.extract_strided_slice %154 {offsets = [0, 96], sizes = [8, 32], strides = [1, 1]} : vector<8x128xf32> to vector<8x32xf32>
    %170 = arith.negf %169 : vector<8x32xf32>
    %171 = math.exp %170 : vector<8x32xf32>
    %cst_55 = arith.constant 1.000000e+00 : f32
    %172 = vector.broadcast %cst_55 : f32 to vector<8x32xf32>
    %173 = arith.addf %172, %171 : vector<8x32xf32>
    %174 = arith.divf %172, %173 : vector<8x32xf32>
    %175 = arith.mulf %166, %143 : vector<8x32xf32>
    %176 = arith.mulf %160, %168 : vector<8x32xf32>
    %177 = arith.addf %175, %176 : vector<8x32xf32>
    %178 = math.tanh %177 : vector<8x32xf32>
    %179 = arith.mulf %174, %178 : vector<8x32xf32>
    %180 = arith.index_cast %149 : i32 to index
    %c0_56 = arith.constant 0 : index
    %181 = vector.load %arg14[%180, %c0_56] : memref<64x32xf32, #tpu.memory_space<vmem>>, vector<8x32xf32>
    tpu.vector_store %arg14[%180, %c0_56], %179 {strides = array<i32>} : memref<64x32xf32, #tpu.memory_space<vmem>>, vector<8x32xf32>,
    %c5_i32 = arith.constant 5 : i32
    %c8_i32_57 = arith.constant 8 : i32
    %182 = arith.muli %c5_i32, %c8_i32_57 : i32
    %183 = tpu.assume_multiple %182, 8 : i32
    %184 = arith.index_cast %183 : i32 to index
    %c0_58 = arith.constant 0 : index
    %185 = vector.load %arg13[%184, %c0_58] : memref<64x128xf32, #tpu.memory_space<vmem>>, vector<8x128xf32>
    %c0_59 = arith.constant 0 : index
    %c0_60 = arith.constant 0 : index
    %186 = vector.load %arg6[%c0_59, %c0_60] : memref<32x128xf32, #tpu.memory_space<vmem>>, vector<32x128xf32>
    %cst_61 = arith.constant dense<0.000000e+00> : vector<8x128xf32>
    %187 = tpu.matmul %179, %186, %cst_61 {dimension_numbers = #tpu.dot_dimension_numbers<[1], [0], [0], [1], [0, 0, 1, 1], [], []>} : vector<8x32xf32>, vector<32x128xf32>, vector<8x128xf32> -> vector<8x128xf32>
    %188 = arith.addf %185, %187 : vector<8x128xf32>
    %189 = vector.extract_strided_slice %188 {offsets = [0, 0], sizes = [8, 32], strides = [1, 1]} : vector<8x128xf32> to vector<8x32xf32>
    %190 = arith.negf %189 : vector<8x32xf32>
    %191 = math.exp %190 : vector<8x32xf32>
    %cst_62 = arith.constant 1.000000e+00 : f32
    %192 = vector.broadcast %cst_62 : f32 to vector<8x32xf32>
    %193 = arith.addf %192, %191 : vector<8x32xf32>
    %194 = arith.divf %192, %193 : vector<8x32xf32>
    %195 = vector.extract_strided_slice %188 {offsets = [0, 32], sizes = [8, 32], strides = [1, 1]} : vector<8x128xf32> to vector<8x32xf32>
    %196 = arith.negf %195 : vector<8x32xf32>
    %197 = math.exp %196 : vector<8x32xf32>
    %cst_63 = arith.constant 1.000000e+00 : f32
    %198 = vector.broadcast %cst_63 : f32 to vector<8x32xf32>
    %199 = arith.addf %198, %197 : vector<8x32xf32>
    %200 = arith.divf %198, %199 : vector<8x32xf32>
    %201 = vector.extract_strided_slice %188 {offsets = [0, 64], sizes = [8, 32], strides = [1, 1]} : vector<8x128xf32> to vector<8x32xf32>
    %202 = math.tanh %201 : vector<8x32xf32>
    %203 = vector.extract_strided_slice %188 {offsets = [0, 96], sizes = [8, 32], strides = [1, 1]} : vector<8x128xf32> to vector<8x32xf32>
    %204 = arith.negf %203 : vector<8x32xf32>
    %205 = math.exp %204 : vector<8x32xf32>
    %cst_64 = arith.constant 1.000000e+00 : f32
    %206 = vector.broadcast %cst_64 : f32 to vector<8x32xf32>
    %207 = arith.addf %206, %205 : vector<8x32xf32>
    %208 = arith.divf %206, %207 : vector<8x32xf32>
    %209 = arith.mulf %200, %177 : vector<8x32xf32>
    %210 = arith.mulf %194, %202 : vector<8x32xf32>
    %211 = arith.addf %209, %210 : vector<8x32xf32>
    %212 = math.tanh %211 : vector<8x32xf32>
    %213 = arith.mulf %208, %212 : vector<8x32xf32>
    %214 = arith.index_cast %183 : i32 to index
    %c0_65 = arith.constant 0 : index
    %215 = vector.load %arg14[%214, %c0_65] : memref<64x32xf32, #tpu.memory_space<vmem>>, vector<8x32xf32>
    tpu.vector_store %arg14[%214, %c0_65], %213 {strides = array<i32>} : memref<64x32xf32, #tpu.memory_space<vmem>>, vector<8x32xf32>,
    %c6_i32 = arith.constant 6 : i32
    %c8_i32_66 = arith.constant 8 : i32
    %216 = arith.muli %c6_i32, %c8_i32_66 : i32
    %217 = tpu.assume_multiple %216, 8 : i32
    %218 = arith.index_cast %217 : i32 to index
    %c0_67 = arith.constant 0 : index
    %219 = vector.load %arg13[%218, %c0_67] : memref<64x128xf32, #tpu.memory_space<vmem>>, vector<8x128xf32>
    %c0_68 = arith.constant 0 : index
    %c0_69 = arith.constant 0 : index
    %220 = vector.load %arg6[%c0_68, %c0_69] : memref<32x128xf32, #tpu.memory_space<vmem>>, vector<32x128xf32>
    %cst_70 = arith.constant dense<0.000000e+00> : vector<8x128xf32>
    %221 = tpu.matmul %213, %220, %cst_70 {dimension_numbers = #tpu.dot_dimension_numbers<[1], [0], [0], [1], [0, 0, 1, 1], [], []>} : vector<8x32xf32>, vector<32x128xf32>, vector<8x128xf32> -> vector<8x128xf32>
    %222 = arith.addf %219, %221 : vector<8x128xf32>
    %223 = vector.extract_strided_slice %222 {offsets = [0, 0], sizes = [8, 32], strides = [1, 1]} : vector<8x128xf32> to vector<8x32xf32>
    %224 = arith.negf %223 : vector<8x32xf32>
    %225 = math.exp %224 : vector<8x32xf32>
    %cst_71 = arith.constant 1.000000e+00 : f32
    %226 = vector.broadcast %cst_71 : f32 to vector<8x32xf32>
    %227 = arith.addf %226, %225 : vector<8x32xf32>
    %228 = arith.divf %226, %227 : vector<8x32xf32>
    %229 = vector.extract_strided_slice %222 {offsets = [0, 32], sizes = [8, 32], strides = [1, 1]} : vector<8x128xf32> to vector<8x32xf32>
    %230 = arith.negf %229 : vector<8x32xf32>
    %231 = math.exp %230 : vector<8x32xf32>
    %cst_72 = arith.constant 1.000000e+00 : f32
    %232 = vector.broadcast %cst_72 : f32 to vector<8x32xf32>
    %233 = arith.addf %232, %231 : vector<8x32xf32>
    %234 = arith.divf %232, %233 : vector<8x32xf32>
    %235 = vector.extract_strided_slice %222 {offsets = [0, 64], sizes = [8, 32], strides = [1, 1]} : vector<8x128xf32> to vector<8x32xf32>
    %236 = math.tanh %235 : vector<8x32xf32>
    %237 = vector.extract_strided_slice %222 {offsets = [0, 96], sizes = [8, 32], strides = [1, 1]} : vector<8x128xf32> to vector<8x32xf32>
    %238 = arith.negf %237 : vector<8x32xf32>
    %239 = math.exp %238 : vector<8x32xf32>
    %cst_73 = arith.constant 1.000000e+00 : f32
    %240 = vector.broadcast %cst_73 : f32 to vector<8x32xf32>
    %241 = arith.addf %240, %239 : vector<8x32xf32>
    %242 = arith.divf %240, %241 : vector<8x32xf32>
    %243 = arith.mulf %234, %211 : vector<8x32xf32>
    %244 = arith.mulf %228, %236 : vector<8x32xf32>
    %245 = arith.addf %243, %244 : vector<8x32xf32>
    %246 = math.tanh %245 : vector<8x32xf32>
    %247 = arith.mulf %242, %246 : vector<8x32xf32>
    %248 = arith.index_cast %217 : i32 to index
    %c0_74 = arith.constant 0 : index
    %249 = vector.load %arg14[%248, %c0_74] : memref<64x32xf32, #tpu.memory_space<vmem>>, vector<8x32xf32>
    tpu.vector_store %arg14[%248, %c0_74], %247 {strides = array<i32>} : memref<64x32xf32, #tpu.memory_space<vmem>>, vector<8x32xf32>,
    %c7_i32 = arith.constant 7 : i32
    %c8_i32_75 = arith.constant 8 : i32
    %250 = arith.muli %c7_i32, %c8_i32_75 : i32
    %251 = tpu.assume_multiple %250, 8 : i32
    %252 = arith.index_cast %251 : i32 to index
    %c0_76 = arith.constant 0 : index
    %253 = vector.load %arg13[%252, %c0_76] : memref<64x128xf32, #tpu.memory_space<vmem>>, vector<8x128xf32>
    %c0_77 = arith.constant 0 : index
    %c0_78 = arith.constant 0 : index
    %254 = vector.load %arg6[%c0_77, %c0_78] : memref<32x128xf32, #tpu.memory_space<vmem>>, vector<32x128xf32>
    %cst_79 = arith.constant dense<0.000000e+00> : vector<8x128xf32>
    %255 = tpu.matmul %247, %254, %cst_79 {dimension_numbers = #tpu.dot_dimension_numbers<[1], [0], [0], [1], [0, 0, 1, 1], [], []>} : vector<8x32xf32>, vector<32x128xf32>, vector<8x128xf32> -> vector<8x128xf32>
    %256 = arith.addf %253, %255 : vector<8x128xf32>
    %257 = vector.extract_strided_slice %256 {offsets = [0, 0], sizes = [8, 32], strides = [1, 1]} : vector<8x128xf32> to vector<8x32xf32>
    %258 = arith.negf %257 : vector<8x32xf32>
    %259 = math.exp %258 : vector<8x32xf32>
    %cst_80 = arith.constant 1.000000e+00 : f32
    %260 = vector.broadcast %cst_80 : f32 to vector<8x32xf32>
    %261 = arith.addf %260, %259 : vector<8x32xf32>
    %262 = arith.divf %260, %261 : vector<8x32xf32>
    %263 = vector.extract_strided_slice %256 {offsets = [0, 32], sizes = [8, 32], strides = [1, 1]} : vector<8x128xf32> to vector<8x32xf32>
    %264 = arith.negf %263 : vector<8x32xf32>
    %265 = math.exp %264 : vector<8x32xf32>
    %cst_81 = arith.constant 1.000000e+00 : f32
    %266 = vector.broadcast %cst_81 : f32 to vector<8x32xf32>
    %267 = arith.addf %266, %265 : vector<8x32xf32>
    %268 = arith.divf %266, %267 : vector<8x32xf32>
    %269 = vector.extract_strided_slice %256 {offsets = [0, 64], sizes = [8, 32], strides = [1, 1]} : vector<8x128xf32> to vector<8x32xf32>
    %270 = math.tanh %269 : vector<8x32xf32>
    %271 = vector.extract_strided_slice %256 {offsets = [0, 96], sizes = [8, 32], strides = [1, 1]} : vector<8x128xf32> to vector<8x32xf32>
    %272 = arith.negf %271 : vector<8x32xf32>
    %273 = math.exp %272 : vector<8x32xf32>
    %cst_82 = arith.constant 1.000000e+00 : f32
    %274 = vector.broadcast %cst_82 : f32 to vector<8x32xf32>
    %275 = arith.addf %274, %273 : vector<8x32xf32>
    %276 = arith.divf %274, %275 : vector<8x32xf32>
    %277 = arith.mulf %268, %245 : vector<8x32xf32>
    %278 = arith.mulf %262, %270 : vector<8x32xf32>
    %279 = arith.addf %277, %278 : vector<8x32xf32>
    %280 = math.tanh %279 : vector<8x32xf32>
    %281 = arith.mulf %276, %280 : vector<8x32xf32>
    %282 = arith.index_cast %251 : i32 to index
    %c0_83 = arith.constant 0 : index
    %283 = vector.load %arg14[%282, %c0_83] : memref<64x32xf32, #tpu.memory_space<vmem>>, vector<8x32xf32>
    tpu.vector_store %arg14[%282, %c0_83], %281 {strides = array<i32>} : memref<64x32xf32, #tpu.memory_space<vmem>>, vector<8x32xf32>,
    %c8_i32_84 = arith.constant 8 : i32
    %c0_85 = arith.constant 0 : index
    %c0_86 = arith.constant 0 : index
    %284 = vector.load %arg11[%c0_85, %c0_86] : memref<8x32xf32, #tpu.memory_space<vmem>>, vector<8x32xf32>
    tpu.vector_store %arg11[%c0_85, %c0_86], %281 {strides = array<i32>} : memref<8x32xf32, #tpu.memory_space<vmem>>, vector<8x32xf32>,
    %c0_87 = arith.constant 0 : index
    %c0_88 = arith.constant 0 : index
    %285 = vector.load %arg12[%c0_87, %c0_88] : memref<8x32xf32, #tpu.memory_space<vmem>>, vector<8x32xf32>
    tpu.vector_store %arg12[%c0_87, %c0_88], %279 {strides = array<i32>} : memref<8x32xf32, #tpu.memory_space<vmem>>, vector<8x32xf32>,
    %c0_89 = arith.constant 0 : index
    %c0_90 = arith.constant 0 : index
    %286 = vector.load %arg14[%c0_89, %c0_90] : memref<64x32xf32, #tpu.memory_space<vmem>>, vector<64x32xf32>
    %c0_91 = arith.constant 0 : index
    %c0_92 = arith.constant 0 : index
    %287 = vector.load %arg8[%c0_91, %c0_92] : memref<32x128xf32, #tpu.memory_space<vmem>>, vector<32x128xf32>
    %cst_93 = arith.constant dense<0.000000e+00> : vector<64x128xf32>
    %288 = tpu.matmul %286, %287, %cst_93 {dimension_numbers = #tpu.dot_dimension_numbers<[1], [0], [0], [1], [0, 0, 1, 1], [], []>} : vector<64x32xf32>, vector<32x128xf32>, vector<64x128xf32> -> vector<64x128xf32>
    %c0_94 = arith.constant 0 : index
    %c0_95 = arith.constant 0 : index
    %289 = vector.load %arg9[%c0_94, %c0_95] : memref<1x128xf32, #tpu.memory_space<vmem>>, vector<1x128xf32>
    %290 = vector.broadcast %289 : vector<1x128xf32> to vector<64x128xf32>
    %291 = arith.addf %288, %290 : vector<64x128xf32>
    %c0_96 = arith.constant 0 : index
    %c0_97 = arith.constant 0 : index
    %292 = vector.load %arg10[%c0_96, %c0_97] : memref<64x128xf32, #tpu.memory_space<vmem>>, vector<64x128xf32>
    tpu.vector_store %arg10[%c0_96, %c0_97], %291 {strides = array<i32>} : memref<64x128xf32, #tpu.memory_space<vmem>>, vector<64x128xf32>,
    return
  }
  func.func @transform_0(%arg0: i32) -> (i32, i32) {
    %c0_i32 = arith.constant 0 : i32
    %c0_i32_0 = arith.constant 0 : i32
    return %arg0, %c0_i32 : i32, i32
  }
  func.func @transform_1(%arg0: i32) -> (i32, i32) {
    %c0_i32 = arith.constant 0 : i32
    %c0_i32_0 = arith.constant 0 : i32
    %c0_i32_1 = arith.constant 0 : i32
    return %c0_i32, %c0_i32_0 : i32, i32
  }
  func.func @transform_2(%arg0: i32) -> (i32, i32) {
    %c0_i32 = arith.constant 0 : i32
    %c0_i32_0 = arith.constant 0 : i32
    %c0_i32_1 = arith.constant 0 : i32
    return %c0_i32, %c0_i32_0 : i32, i32
  }
  func.func @transform_3(%arg0: i32) -> (i32, i32) {
    %c0_i32 = arith.constant 0 : i32
    %c0_i32_0 = arith.constant 0 : i32
    %c0_i32_1 = arith.constant 0 : i32
    return %c0_i32, %c0_i32_0 : i32, i32
  }
  func.func @transform_4(%arg0: i32) -> (i32, i32) {
    %c0_i32 = arith.constant 0 : i32
    %c0_i32_0 = arith.constant 0 : i32
    %c0_i32_1 = arith.constant 0 : i32
    return %c0_i32, %c0_i32_0 : i32, i32
  }
  func.func @transform_5(%arg0: i32) -> (i32, i32) {
    %c0_i32 = arith.constant 0 : i32
    %c0_i32_0 = arith.constant 0 : i32
    %c0_i32_1 = arith.constant 0 : i32
    return %c0_i32, %c0_i32_0 : i32, i32
  }
  func.func @transform_6(%arg0: i32) -> (i32, i32) {
    %c0_i32 = arith.constant 0 : i32
    %c0_i32_0 = arith.constant 0 : i32
    %c0_i32_1 = arith.constant 0 : i32
    return %c0_i32, %c0_i32_0 : i32, i32
  }
  func.func @transform_7(%arg0: i32) -> (i32, i32) {
    %c0_i32 = arith.constant 0 : i32
    %c0_i32_0 = arith.constant 0 : i32
    %c0_i32_1 = arith.constant 0 : i32
    return %c0_i32, %c0_i32_0 : i32, i32
  }
  func.func @transform_8(%arg0: i32) -> (i32, i32) {
    %c0_i32 = arith.constant 0 : i32
    %c0_i32_0 = arith.constant 0 : i32
    %c0_i32_1 = arith.constant 0 : i32
    return %c0_i32, %c0_i32_0 : i32, i32
  }
  func.func @transform_9(%arg0: i32) -> (i32, i32) {
    %c0_i32 = arith.constant 0 : i32
    %c0_i32_0 = arith.constant 0 : i32
    return %arg0, %c0_i32 : i32, i32
  }
  func.func @transform_10(%arg0: i32) -> (i32, i32) {
    %c0_i32 = arith.constant 0 : i32
    %c0_i32_0 = arith.constant 0 : i32
    %c0_i32_1 = arith.constant 0 : i32
    return %c0_i32, %c0_i32_0 : i32, i32
  }
  func.func @transform_11(%arg0: i32) -> (i32, i32) {
    %c0_i32 = arith.constant 0 : i32
    %c0_i32_0 = arith.constant 0 : i32
    %c0_i32_1 = arith.constant 0 : i32
    return %c0_i32, %c0_i32_0 : i32, i32
  }
}

</mosaic_0001>

<llo_original>
// kernel: tpu_custom_call.1
$region0: #{tpu_custom_call.1}
  #allocation0 [shape = 'u32[]', space=smem, size = 0x4, offset = 0x4, fixed_abs, tag = 'smem constant byte address 0x4 - core index']
  #allocation1 [shape = 'u32[144,128]{1,0:T(1,128)}', space=vmem, size = 0x12000, scoped, tag = 'internal scratch']
  #allocation2 [shape = 'f32[64,128]{1,0:T(8,128)}', space=vmem, size = 0x8000, scoped, tag = 'scratch operand']
  #allocation3 [shape = 'f32[64,32]{1,0:T(8,128)}', space=vmem, size = 0x8000, scoped, tag = 'scratch operand']
  %s0 = inlined_call_operand.vmem [shape: f32[64,13], index: 0, kind: input, shape index: {}]
  %s1 = inlined_call_operand.hbm [shape: f32[8,8], index: 1, kind: input, shape index: {}]
  %s2 = inlined_call_operand.hbm [shape: f32[8,64], index: 2, kind: input, shape index: {}]
  %s3 = inlined_call_operand.vmem [shape: f32[1,64], index: 3, kind: input, shape index: {}]
  %s4 = inlined_call_operand.vmem [shape: f32[13,128], index: 4, kind: input, shape index: {}]
  %s5 = inlined_call_operand.vmem [shape: f32[32,128], index: 5, kind: input, shape index: {}]
  %s6 = inlined_call_operand.vmem [shape: f32[1,128], index: 6, kind: input, shape index: {}]
  %s7 = inlined_call_operand.vmem [shape: f32[32,128], index: 7, kind: input, shape index: {}]
  %s8 = inlined_call_operand.vmem [shape: f32[1,128], index: 8, kind: input, shape index: {}]
  %s9 = inlined_call_operand.hbm [shape: f32[64,128], index: 9, kind: output, shape index: {0}]
  %s10 = inlined_call_operand.hbm [shape: f32[8,32], index: 10, kind: output, shape index: {1}]
  %s11 = inlined_call_operand.hbm [shape: f32[8,32], index: 11, kind: output, shape index: {2}]
  %12 = xla_tuple %s9, %s10, %s11
  %s13 = sld [smem:[#allocation0]]
  $region74: #{tpu_custom_call.1} parent=0
    _
  %s15 = ssub.s32 1, %s13
  %s16 = scalar_select 0, %s15, %s13
  $region1: #{tpu_custom_call.1} parent=0
    #allocation4 [shape = 'u8[4096]{0}', space=vmem, size = 0x1000, scoped, tag = 'input window, operand 1, single buffered']
    #allocation5 [shape = 's32[1]{0}', space=sflag, size = 0x4, scoped, tag = 'scoped memory for tpu_custom_call.1']
    #allocation6 [shape = 's32[1]{0}', space=sflag, size = 0x4, scoped, tag = 'scoped memory for tpu_custom_call.1']
    #allocation7 [shape = 'u8[4096]{0}', space=vmem, size = 0x1000, scoped, tag = 'input window, operand 2, single buffered']
    #allocation8 [shape = 's32[1]{0}', space=sflag, size = 0x4, scoped, tag = 'scoped memory for tpu_custom_call.1']
    #allocation9 [shape = 'u8[32768]{0}', space=vmem, size = 0x8000, scoped, tag = 'output window, operand 0, single buffered']
    #allocation10 [shape = 'u8[4096]{0}', space=vmem, size = 0x1000, scoped, tag = 'output window, operand 1, single buffered']
    #allocation11 [shape = 's32[1]{0}', space=sflag, size = 0x4, scoped, tag = 'scoped memory for tpu_custom_call.1']
    #allocation12 [shape = 'u8[4096]{0}', space=vmem, size = 0x1000, scoped, tag = 'output window, operand 2, single buffered']
    %17 = vsyncpa [#allocation5], 0
    %18 = vsyncpa [#allocation8], 0
    %19 = vsyncpa [#allocation6], 0
    %20 = vsyncpa [#allocation11], 0
    // Predicated region
    $region2: #{tpu_custom_call.1} parent=1 // pred_check
      _
    $region3: #{tpu_custom_call.1} parent=1 // pred_check_branch
      %22 = sbr.rel (0) target = $region5
    $region4: #{tpu_custom_call.1} parent=1 // pred_region
      _
    $region5: #{tpu_custom_call.1} parent=1 // pred_fallthru
      _
    // Predicated region
    $region6: #{tpu_custom_call.1} parent=1 // pred_check
      _
    $region7: #{tpu_custom_call.1} parent=1 // pred_check_branch
      %24 = sbr.rel (0) target = $region9
    $region8: #{tpu_custom_call.1} parent=1 // pred_region
      %s26 = ssub.s32 128, 128
      %27 = vsyncadd [#allocation5], %s26
      %s29 = sshll.u32 [#allocation4], 4
      %s30 = int_to_ptr.vmem [resolvable:$true] %s29
      %32 = dma.hbm_to_vmem [thread:$0]  %s1, 128, %s30, [#allocation5]
    $region9: #{tpu_custom_call.1} parent=1 // pred_fallthru
      _
    // Predicated region
    $region10: #{tpu_custom_call.1} parent=1 // pred_check
      _
    $region11: #{tpu_custom_call.1} parent=1 // pred_check_branch
      %34 = sbr.rel (0) target = $region13
    $region12: #{tpu_custom_call.1} parent=1 // pred_region
      %s36 = ssub.s32 128, 128
      %37 = vsyncadd [#allocation8], %s36
      %s39 = sshll.u32 [#allocation7], 4
      %s40 = int_to_ptr.vmem [resolvable:$true] %s39
      %42 = dma.hbm_to_vmem [thread:$0]  %s2, 128, %s40, [#allocation8]
    $region13: #{tpu_custom_call.1} parent=1 // pred_fallthru
      _
    // Predicated region
    $region14: #{tpu_custom_call.1} parent=1 // pred_check
      _
    $region15: #{tpu_custom_call.1} parent=1 // pred_check_branch
      %44 = sbr.rel (0) target = $region17
    $region16: #{tpu_custom_call.1} parent=1 // pred_region
      _
    $region17: #{tpu_custom_call.1} parent=1 // pred_fallthru
      _
    // Predicated region
    $region18: #{tpu_custom_call.1} parent=1 // pred_check
      _
    $region19: #{tpu_custom_call.1} parent=1 // pred_check_branch
      %46 = sbr.rel (0) target = $region21
    $region20: #{tpu_custom_call.1} parent=1 // pred_region
      _
    $region21: #{tpu_custom_call.1} parent=1 // pred_fallthru
      _
    // Predicated region
    $region22: #{tpu_custom_call.1} parent=1 // pred_check
      _
    $region23: #{tpu_custom_call.1} parent=1 // pred_check_branch
      %48 = sbr.rel (0) target = $region25
    $region24: #{tpu_custom_call.1} parent=1 // pred_region
      _
    $region25: #{tpu_custom_call.1} parent=1 // pred_fallthru
      _
    // Predicated region
    $region26: #{tpu_custom_call.1} parent=1 // pred_check
      _
    $region27: #{tpu_custom_call.1} parent=1 // pred_check_branch
      %50 = sbr.rel (0) target = $region29
    $region28: #{tpu_custom_call.1} parent=1 // pred_region
      _
    $region29: #{tpu_custom_call.1} parent=1 // pred_fallthru
      _
    // Predicated region
    $region30: #{tpu_custom_call.1} parent=1 // pred_check
      _
    $region31: #{tpu_custom_call.1} parent=1 // pred_check_branch
      %52 = sbr.rel (0) target = $region33
    $region32: #{tpu_custom_call.1} parent=1 // pred_region
      _
    $region33: #{tpu_custom_call.1} parent=1 // pred_fallthru
      _
    // Predicated region
    $region34: #{tpu_custom_call.1} parent=1 // pred_check
      _
    $region35: #{tpu_custom_call.1} parent=1 // pred_check_branch
      %54 = sbr.rel (0) target = $region37
    $region36: #{tpu_custom_call.1} parent=1 // pred_region
      _
    $region37: #{tpu_custom_call.1} parent=1 // pred_fallthru
      _
    // Predicated region
    $region38: #{tpu_custom_call.1} parent=1 // pred_check
      _
    $region39: #{tpu_custom_call.1} parent=1 // pred_check_branch
      %56 = sbr.rel (0) target = $region41
    $region40: #{tpu_custom_call.1} parent=1 // pred_region
      %57 = dma.done [#allocation5], 128
    $region41: #{tpu_custom_call.1} parent=1 // pred_fallthru
      _
    // Predicated region
    $region42: #{tpu_custom_call.1} parent=1 // pred_check
      _
    $region43: #{tpu_custom_call.1} parent=1 // pred_check_branch
      %59 = sbr.rel (0) target = $region45
    $region44: #{tpu_custom_call.1} parent=1 // pred_region
      %60 = dma.done [#allocation8], 128
    $region45: #{tpu_custom_call.1} parent=1 // pred_fallthru
      _
    %p61 = scmp.eq.s32.totalorder 0, 0
    // Predicated region
    $region46: #{tpu_custom_call.1} parent=1 // pred_check
      %p62 = pneg %p61
    $region47: #{tpu_custom_call.1} parent=1 // pred_check_branch
      %64 = sbr.rel (%p62) target = $region49
    $region48: #{tpu_custom_call.1} parent=1 // pred_region
      %v65 = vld [vmem:[#allocation4] sm:$0xff]
      %v66 = vld [vmem:[#allocation7] sm:$0xff]
      %v67 = vld [vmem:[%s3] sm:$0x1]
      %v69 = vlaneseq
      %v70 = vshrl.u32 %v69, 7
      %v71 = vsub.s32 0, %v70
      %v72 = vrot.slane %v67, %v71
      %vm74 = vcmask 64512
      %v76 = vsel %vm74, %v65, 0
      %78 = vmatprep.subr.mxu0 0.0
      %79 = vmatpush1.msra.mxu0 %v66
      %80 = vmatprep.subr.mxu0 0.0
      %81 = vmatpush1.msra.mxu0 0.0
      %82 = vmatprep.subr.mxu0 0.0
      %83 = vmatpush1.msra.mxu0 0.0
      %84 = vmatprep.subr.mxu0 0.0
      %85 = vmatpush1.msra.mxu0 0.0
      %86 = vmatprep.subr.mxu0 0.0
      %87 = vmatpush1.msra.mxu0 0.0
      %88 = vmatprep.subr.mxu0 0.0
      %89 = vmatpush1.msra.mxu0 0.0
      %90 = vmatprep.subr.mxu0 0.0
      %91 = vmatpush1.msra.mxu0 0.0
      %92 = vmatprep.subr.mxu0 0.0
      %93 = vmatpush1.msra.mxu0 0.0
      %94 = vmatprep.subr.mxu0 0.0
      %95 = vmatpush1.msra.mxu0 0.0
      %96 = vmatprep.subr.mxu0 0.0
      %97 = vmatpush1.msra.mxu0 0.0
      %98 = vmatprep.subr.mxu0 0.0
      %99 = vmatpush1.msra.mxu0 0.0
      %100 = vmatprep.subr.mxu0 0.0
      %101 = vmatpush1.msra.mxu0 0.0
      %102 = vmatprep.subr.mxu0 0.0
      %103 = vmatpush1.msra.mxu0 0.0
      %104 = vmatprep.subr.mxu0 0.0
      %105 = vmatpush1.msra.mxu0 0.0
      %106 = vmatprep.subr.mxu0 0.0
      %107 = vmatpush1.msra.mxu0 0.0
      %108 = vmatprep.subr.mxu0 0.0
      %109 = vmatpush1.msra.mxu0 0.0
      %110 = vmatprep.subr.mxu0 0.0
      %111 = vmatpush1.msra.mxu0 0.0
      %112 = vmatprep.subr.mxu0 0.0
      %113 = vmatpush1.msra.mxu0 0.0
      %114 = vmatprep.subr.mxu0 0.0
      %115 = vmatpush1.msra.mxu0 0.0
      %116 = vmatprep.subr.mxu0 0.0
      %117 = vmatpush1.msra.mxu0 0.0
      %118 = vmatprep.subr.mxu0 0.0
      %119 = vmatpush1.msra.mxu0 0.0
      %120 = vmatprep.subr.mxu0 0.0
      %121 = vmatpush1.msra.mxu0 0.0
      %122 = vmatprep.subr.mxu0 0.0
      %123 = vmatpush1.msra.mxu0 0.0
      %124 = vmatprep.subr.mxu0 0.0
      %125 = vmatpush1.msra.mxu0 0.0
      %126 = vmatprep.subr.mxu0 0.0
      %127 = vmatpush1.msra.mxu0 0.0
      %128 = vmatprep.subr.mxu0 0.0
      %129 = vmatpush1.msra.mxu0 0.0
      %130 = vmatprep.subr.mxu0 0.0
      %131 = vmatpush1.msra.mxu0 0.0
      %132 = vmatprep.subr.mxu0 0.0
      %133 = vmatpush1.msra.mxu0 0.0
      %134 = vmatprep.subr.mxu0 0.0
      %135 = vmatpush1.msra.mxu0 0.0
      %136 = vmatprep.subr.mxu0 0.0
      %137 = vmatpush1.msra.mxu0 0.0
      %138 = vmatprep.subr.mxu0 0.0
      %139 = vmatpush1.msra.mxu0 0.0
      %140 = vmatprep.subr.mxu0 0.0
      %141 = vmatpush1.msra.mxu0 0.0
      %142 = vmatprep.mubr.f32.mxu0 0.0
      %143 = vmatmul.mubr.f32.gmra.mrb[0].mxu0 %v76
      %v144 = vpop.f32.mrb[0].mxu0
      %v145 = vadd.f32 %v72, %v144
      %v146 = vpop.f32.mrb[0].mxu0
      %147 = vdwg.mxu0
      %v148 = vtanh.pop %v145
      %vm149 = vcmask 261120
      %150 = vst.msk [vmem:[#allocation10] sm:$0xff] %vm149, %v148
      %152 = vrot.lane.b32.xlu0 %v148, 96
      %v153 = vpop.permute.xlu0 %152
      %155 = vst.msk [vmem:[#allocation12] sm:$0xff] %vm149, %v153
    $region49: #{tpu_custom_call.1} parent=1 // pred_fallthru
      _
    %v156 = vld [vmem:[%s0] sm:$0xff]
    %v157 = vld [vmem:[%s0 + $0x8] sm:$0xff]
    %v158 = vld [vmem:[%s0 + $0x10] sm:$0xff]
    %v159 = vld [vmem:[%s0 + $0x18] sm:$0xff]
    %v160 = vld [vmem:[%s0 + $0x20] sm:$0xff]
    %v161 = vld [vmem:[%s0 + $0x28] sm:$0xff]
    %v162 = vld [vmem:[%s0 + $0x30] sm:$0xff]
    %v163 = vld [vmem:[%s0 + $0x38] sm:$0xff]
    %v164 = vld [vmem:[%s4] sm:$0xff]
    %v165 = vld [vmem:[%s4 + $0x8] sm:$0x1f]
    %v166 = vld [vmem:[%s6] sm:$0x1]
    %v168 = vlaneseq
    %v169 = vshrl.u32 %v168, 7
    %v170 = vsub.s32 0, %v169
    %v171 = vrot.slane %v166, %v170
    %vm173 = vcmask 105472
    %v175 = vsel %vm173, %v156, 0
    %v178 = vsel %vm173, %v157, 0
    %v181 = vsel %vm173, %v158, 0
    %v184 = vsel %vm173, %v159, 0
    %v187 = vsel %vm173, %v160, 0
    %v190 = vsel %vm173, %v161, 0
    %v193 = vsel %vm173, %v162, 0
    %v196 = vsel %vm173, %v163, 0
    %vm198 = vcmask 1044480
    %v200 = vsel %vm198, %v165, 0
    %202 = vmatprep.subr.mxu0 0.0
    %203 = vmatpush1.msra.mxu0 %v164
    %204 = vmatprep.subr.mxu0 0.0
    %205 = vmatpush1.msra.mxu0 %v200
    %206 = vmatprep.subr.mxu0 0.0
    %207 = vmatpush1.msra.mxu0 0.0
    %208 = vmatprep.subr.mxu0 0.0
    %209 = vmatpush1.msra.mxu0 0.0
    %210 = vmatprep.subr.mxu0 0.0
    %211 = vmatpush1.msra.mxu0 0.0
    %212 = vmatprep.subr.mxu0 0.0
    %213 = vmatpush1.msra.mxu0 0.0
    %214 = vmatprep.subr.mxu0 0.0
    %215 = vmatpush1.msra.mxu0 0.0
    %216 = vmatprep.subr.mxu0 0.0
    %217 = vmatpush1.msra.mxu0 0.0
    %218 = vmatprep.subr.mxu0 0.0
    %219 = vmatpush1.msra.mxu0 0.0
    %220 = vmatprep.subr.mxu0 0.0
    %221 = vmatpush1.msra.mxu0 0.0
    %222 = vmatprep.subr.mxu0 0.0
    %223 = vmatpush1.msra.mxu0 0.0
    %224 = vmatprep.subr.mxu0 0.0
    %225 = vmatpush1.msra.mxu0 0.0
    %226 = vmatprep.subr.mxu0 0.0
    %227 = vmatpush1.msra.mxu0 0.0
    %228 = vmatprep.subr.mxu0 0.0
    %229 = vmatpush1.msra.mxu0 0.0
    %230 = vmatprep.subr.mxu0 0.0
    %231 = vmatpush1.msra.mxu0 0.0
    %232 = vmatprep.subr.mxu0 0.0
    %233 = vmatpush1.msra.mxu0 0.0
    %234 = vmatprep.subr.mxu0 0.0
    %235 = vmatpush1.msra.mxu0 0.0
    %236 = vmatprep.subr.mxu0 0.0
    %237 = vmatpush1.msra.mxu0 0.0
    %238 = vmatprep.subr.mxu0 0.0
    %239 = vmatpush1.msra.mxu0 0.0
    %240 = vmatprep.subr.mxu0 0.0
    %241 = vmatpush1.msra.mxu0 0.0
    %242 = vmatprep.subr.mxu0 0.0
    %243 = vmatpush1.msra.mxu0 0.0
    %244 = vmatprep.subr.mxu0 0.0
    %245 = vmatpush1.msra.mxu0 0.0
    %246 = vmatprep.subr.mxu0 0.0
    %247 = vmatpush1.msra.mxu0 0.0
    %248 = vmatprep.subr.mxu0 0.0
    %249 = vmatpush1.msra.mxu0 0.0
    %250 = vmatprep.subr.mxu0 0.0
    %251 = vmatpush1.msra.mxu0 0.0
    %252 = vmatprep.subr.mxu0 0.0
    %253 = vmatpush1.msra.mxu0 0.0
    %254 = vmatprep.subr.mxu0 0.0
    %255 = vmatpush1.msra.mxu0 0.0
    %256 = vmatprep.subr.mxu0 0.0
    %257 = vmatpush1.msra.mxu0 0.0
    %258 = vmatprep.subr.mxu0 0.0
    %259 = vmatpush1.msra.mxu0 0.0
    %260 = vmatprep.subr.mxu0 0.0
    %261 = vmatpush1.msra.mxu0 0.0
    %262 = vmatprep.subr.mxu0 0.0
    %263 = vmatpush1.msra.mxu0 0.0
    %264 = vmatprep.subr.mxu0 0.0
    %265 = vmatpush1.msra.mxu0 0.0
    %266 = vmatprep.mubr.f32.mxu0 0.0
    %267 = vmatmul.mubr.f32.gmra.mrb[0].mxu0 %v175
    %v268 = vpop.f32.mrb[0].mxu0
    %v269 = vadd.f32 %v171, %v268
    %v270 = vpop.f32.mrb[0].mxu0
    %271 = vmatprep.mubr.f32.mxu0 0.0
    %272 = vmatmul.mubr.f32.gmra.mrb[0].mxu0 %v178
    %v273 = vpop.f32.mrb[0].mxu0
    %v274 = vadd.f32 %v171, %v273
    %v275 = vpop.f32.mrb[0].mxu0
    %276 = vmatprep.mubr.f32.mxu0 0.0
    %277 = vmatmul.mubr.f32.gmra.mrb[0].mxu0 %v181
    %v278 = vpop.f32.mrb[0].mxu0
    %v279 = vadd.f32 %v171, %v278
    %v280 = vpop.f32.mrb[0].mxu0
    %281 = vmatprep.mubr.f32.mxu0 0.0
    %282 = vmatmul.mubr.f32.gmra.mrb[0].mxu0 %v184
    %v283 = vpop.f32.mrb[0].mxu0
    %v284 = vadd.f32 %v171, %v283
    %v285 = vpop.f32.mrb[0].mxu0
    %286 = vmatprep.mubr.f32.mxu0 0.0
    %287 = vmatmul.mubr.f32.gmra.mrb[0].mxu0 %v187
    %v288 = vpop.f32.mrb[0].mxu0
    %v289 = vadd.f32 %v171, %v288
    %v290 = vpop.f32.mrb[0].mxu0
    %291 = vmatprep.mubr.f32.mxu0 0.0
    %292 = vmatmul.mubr.f32.gmra.mrb[0].mxu0 %v190
    %v293 = vpop.f32.mrb[0].mxu0
    %v294 = vadd.f32 %v171, %v293
    %v295 = vpop.f32.mrb[0].mxu0
    %296 = vmatprep.mubr.f32.mxu0 0.0
    %297 = vmatmul.mubr.f32.gmra.mrb[0].mxu0 %v193
    %v298 = vpop.f32.mrb[0].mxu0
    %v299 = vadd.f32 %v171, %v298
    %v300 = vpop.f32.mrb[0].mxu0
    %301 = vmatprep.mubr.f32.mxu0 0.0
    %302 = vmatmul.mubr.f32.gmra.mrb[0].mxu0 %v196
    %v303 = vpop.f32.mrb[0].mxu0
    %v304 = vadd.f32 %v171, %v303
    %v305 = vpop.f32.mrb[0].mxu0
    %306 = vdwg.mxu0
    %307 = vst [vmem:[#allocation2] sm:$0xff] %v269
    %308 = vst [vmem:[#allocation2 + $0x8] sm:$0xff] %v274
    %309 = vst [vmem:[#allocation2 + $0x10] sm:$0xff] %v279
    %310 = vst [vmem:[#allocation2 + $0x18] sm:$0xff] %v284
    %311 = vst [vmem:[#allocation2 + $0x20] sm:$0xff] %v289
    %312 = vst [vmem:[#allocation2 + $0x28] sm:$0xff] %v294
    %313 = vst [vmem:[#allocation2 + $0x30] sm:$0xff] %v299
    %314 = vst [vmem:[#allocation2 + $0x38] sm:$0xff] %v304
    %v315 = vld [vmem:[#allocation10] sm:$0xff]
    %v316 = vld [vmem:[#allocation12] sm:$0xff]
    %v317 = vld [vmem:[#allocation2] sm:$0xff]
    %v318 = vld [vmem:[%s5] sm:$0xff]
    %v319 = vld [vmem:[%s5 + $0x8] sm:$0xff]
    %v320 = vld [vmem:[%s5 + $0x10] sm:$0xff]
    %v321 = vld [vmem:[%s5 + $0x18] sm:$0xff]
    %vm322 = vcmask 261120
    %v324 = vsel %vm322, %v315, 0
    %326 = vmatprep.subr.mxu0 0.0
    %327 = vmatpush1.msra.mxu0 %v318
    %328 = vmatprep.subr.mxu0 0.0
    %329 = vmatpush1.msra.mxu0 %v319
    %330 = vmatprep.subr.mxu0 0.0
    %331 = vmatpush1.msra.mxu0 %v320
    %332 = vmatprep.subr.mxu0 0.0
    %333 = vmatpush1.msra.mxu0 %v321
    %334 = vmatprep.subr.mxu0 0.0
    %335 = vmatpush1.msra.mxu0 0.0
    %336 = vmatprep.subr.mxu0 0.0
    %337 = vmatpush1.msra.mxu0 0.0
    %338 = vmatprep.subr.mxu0 0.0
    %339 = vmatpush1.msra.mxu0 0.0
    %340 = vmatprep.subr.mxu0 0.0
    %341 = vmatpush1.msra.mxu0 0.0
    %342 = vmatprep.subr.mxu0 0.0
    %343 = vmatpush1.msra.mxu0 0.0
    %344 = vmatprep.subr.mxu0 0.0
    %345 = vmatpush1.msra.mxu0 0.0
    %346 = vmatprep.subr.mxu0 0.0
    %347 = vmatpush1.msra.mxu0 0.0
    %348 = vmatprep.subr.mxu0 0.0
    %349 = vmatpush1.msra.mxu0 0.0
    %350 = vmatprep.subr.mxu0 0.0
    %351 = vmatpush1.msra.mxu0 0.0
    %352 = vmatprep.subr.mxu0 0.0
    %353 = vmatpush1.msra.mxu0 0.0
    %354 = vmatprep.subr.mxu0 0.0
    %355 = vmatpush1.msra.mxu0 0.0
    %356 = vmatprep.subr.mxu0 0.0
    %357 = vmatpush1.msra.mxu0 0.0
    %358 = vmatprep.subr.mxu0 0.0
    %359 = vmatpush1.msra.mxu0 0.0
    %360 = vmatprep.subr.mxu0 0.0
    %361 = vmatpush1.msra.mxu0 0.0
    %362 = vmatprep.subr.mxu0 0.0
    %363 = vmatpush1.msra.mxu0 0.0
    %364 = vmatprep.subr.mxu0 0.0
    %365 = vmatpush1.msra.mxu0 0.0
    %366 = vmatprep.subr.mxu0 0.0
    %367 = vmatpush1.msra.mxu0 0.0
    %368 = vmatprep.subr.mxu0 0.0
    %369 = vmatpush1.msra.mxu0 0.0
    %370 = vmatprep.subr.mxu0 0.0
    %371 = vmatpush1.msra.mxu0 0.0
    %372 = vmatprep.subr.mxu0 0.0
    %373 = vmatpush1.msra.mxu0 0.0
    %374 = vmatprep.subr.mxu0 0.0
    %375 = vmatpush1.msra.mxu0 0.0
    %376 = vmatprep.subr.mxu0 0.0
    %377 = vmatpush1.msra.mxu0 0.0
    %378 = vmatprep.subr.mxu0 0.0
    %379 = vmatpush1.msra.mxu0 0.0
    %380 = vmatprep.subr.mxu0 0.0
    %381 = vmatpush1.msra.mxu0 0.0
    %382 = vmatprep.subr.mxu0 0.0
    %383 = vmatpush1.msra.mxu0 0.0
    %384 = vmatprep.subr.mxu0 0.0
    %385 = vmatpush1.msra.mxu0 0.0
    %386 = vmatprep.subr.mxu0 0.0
    %387 = vmatpush1.msra.mxu0 0.0
    %388 = vmatprep.subr.mxu0 0.0
    %389 = vmatpush1.msra.mxu0 0.0
    %390 = vmatprep.mubr.f32.mxu0 0.0
    %391 = vmatmul.mubr.f32.gmra.mrb[0].mxu0 %v324
    %v392 = vpop.f32.mrb[0].mxu0
    %v393 = vadd.f32 0.0, %v392
    %v394 = vpop.f32.mrb[0].mxu0
    %395 = vdwg.mxu0
    %v396 = vadd.f32 %v317, %v393
    %v397 = vxor.u32 %v396, 2147483648
    %v398 = vmul.f32 %v397, 1.442695
    %v399 = vpow.pop %v398
    %v400 = vadd.f32 %v399, 1.0
    %v401 = vrcp.pop %v400
    %v402 = vmul.f32 1.0, %v401
    %v403 = vtanh.pop %v396
    %405 = vrot.lane.b32.xlu0 %v316, 32
    %v406 = vpop.permute.xlu0 %405
    %v408 = vmul.f32 %v402, %v406
    %410 = vrot.lane.b32.xlu0 %v403, 64
    %v411 = vpop.permute.xlu0 %410
    %v413 = vmul.f32 %v402, %v411
    %415 = vrot.lane.b32.xlu0 %v413, 32
    %v416 = vpop.permute.xlu0 %415
    %v418 = vadd.f32 %v408, %v416
    %v419 = vtanh.pop %v418
    %421 = vrot.lane.b32.xlu0 %v419, 64
    %v422 = vpop.permute.xlu0 %421
    %v424 = vmul.f32 %v402, %v422
    %426 = vrot.lane.b32.xlu0 %v424, 32
    %v427 = vpop.permute.xlu0 %426
    %429 = vst.msk [vmem:[#allocation3] sm:$0xff] %vm322, %v427
    %s430 = scalar_lea.vmem [#allocation2], 8
    %v431 = vld [vmem:[%s430] sm:$0xff]
    %v432 = vld [vmem:[%s5] sm:$0xff]
    %v433 = vld [vmem:[%s5 + $0x8] sm:$0xff]
    %v434 = vld [vmem:[%s5 + $0x10] sm:$0xff]
    %v435 = vld [vmem:[%s5 + $0x18] sm:$0xff]
    %v436 = vsel %vm322, %v427, 0
    %438 = vmatprep.subr.mxu0 0.0
    %439 = vmatpush1.msra.mxu0 %v432
    %440 = vmatprep.subr.mxu0 0.0
    %441 = vmatpush1.msra.mxu0 %v433
    %442 = vmatprep.subr.mxu0 0.0
    %443 = vmatpush1.msra.mxu0 %v434
    %444 = vmatprep.subr.mxu0 0.0
    %445 = vmatpush1.msra.mxu0 %v435
    %446 = vmatprep.subr.mxu0 0.0
    %447 = vmatpush1.msra.mxu0 0.0
    %448 = vmatprep.subr.mxu0 0.0
    %449 = vmatpush1.msra.mxu0 0.0
    %450 = vmatprep.subr.mxu0 0.0
    %451 = vmatpush1.msra.mxu0 0.0
    %452 = vmatprep.subr.mxu0 0.0
    %453 = vmatpush1.msra.mxu0 0.0
    %454 = vmatprep.subr.mxu0 0.0
    %455 = vmatpush1.msra.mxu0 0.0
    %456 = vmatprep.subr.mxu0 0.0
    %457 = vmatpush1.msra.mxu0 0.0
    %458 = vmatprep.subr.mxu0 0.0
    %459 = vmatpush1.msra.mxu0 0.0
    %460 = vmatprep.subr.mxu0 0.0
    %461 = vmatpush1.msra.mxu0 0.0
    %462 = vmatprep.subr.mxu0 0.0
    %463 = vmatpush1.msra.mxu0 0.0
    %464 = vmatprep.subr.mxu0 0.0
    %465 = vmatpush1.msra.mxu0 0.0
    %466 = vmatprep.subr.mxu0 0.0
    %467 = vmatpush1.msra.mxu0 0.0
    %468 = vmatprep.subr.mxu0 0.0
    %469 = vmatpush1.msra.mxu0 0.0
    %470 = vmatprep.subr.mxu0 0.0
    %471 = vmatpush1.msra.mxu0 0.0
    %472 = vmatprep.subr.mxu0 0.0
    %473 = vmatpush1.msra.mxu0 0.0
    %474 = vmatprep.subr.mxu0 0.0
    %475 = vmatpush1.msra.mxu0 0.0
    %476 = vmatprep.subr.mxu0 0.0
    %477 = vmatpush1.msra.mxu0 0.0
    %478 = vmatprep.subr.mxu0 0.0
    %479 = vmatpush1.msra.mxu0 0.0
    %480 = vmatprep.subr.mxu0 0.0
    %481 = vmatpush1.msra.mxu0 0.0
    %482 = vmatprep.subr.mxu0 0.0
    %483 = vmatpush1.msra.mxu0 0.0
    %484 = vmatprep.subr.mxu0 0.0
    %485 = vmatpush1.msra.mxu0 0.0
    %486 = vmatprep.subr.mxu0 0.0
    %487 = vmatpush1.msra.mxu0 0.0
    %488 = vmatprep.subr.mxu0 0.0
    %489 = vmatpush1.msra.mxu0 0.0
    %490 = vmatprep.subr.mxu0 0.0
    %491 = vmatpush1.msra.mxu0 0.0
    %492 = vmatprep.subr.mxu0 0.0
    %493 = vmatpush1.msra.mxu0 0.0
    %494 = vmatprep.subr.mxu0 0.0
    %495 = vmatpush1.msra.mxu0 0.0
    %496 = vmatprep.subr.mxu0 0.0
    %497 = vmatpush1.msra.mxu0 0.0
    %498 = vmatprep.subr.mxu0 0.0
    %499 = vmatpush1.msra.mxu0 0.0
    %500 = vmatprep.subr.mxu0 0.0
    %501 = vmatpush1.msra.mxu0 0.0
    %502 = vmatprep.mubr.f32.mxu0 0.0
    %503 = vmatmul.mubr.f32.gmra.mrb[0].mxu0 %v436
    %v504 = vpop.f32.mrb[0].mxu0
    %v505 = vadd.f32 0.0, %v504
    %v506 = vpop.f32.mrb[0].mxu0
    %507 = vdwg.mxu0
    %v508 = vadd.f32 %v431, %v505
    %v509 = vxor.u32 %v508, 2147483648
    %v510 = vmul.f32 %v509, 1.442695
    %v511 = vpow.pop %v510
    %v512 = vadd.f32 %v511, 1.0
    %v513 = vrcp.pop %v512
    %v514 = vmul.f32 1.0, %v513
    %v515 = vtanh.pop %v508
    %v516 = vmul.f32 %v514, %v418
    %518 = vrot.lane.b32.xlu0 %v515, 64
    %v519 = vpop.permute.xlu0 %518
    %v521 = vmul.f32 %v514, %v519
    %523 = vrot.lane.b32.xlu0 %v521, 32
    %v524 = vpop.permute.xlu0 %523
    %v526 = vadd.f32 %v516, %v524
    %v527 = vtanh.pop %v526
    %529 = vrot.lane.b32.xlu0 %v527, 64
    %v530 = vpop.permute.xlu0 %529
    %v532 = vmul.f32 %v514, %v530
    %534 = vrot.lane.b32.xlu0 %v532, 32
    %v535 = vpop.permute.xlu0 %534
    %s537 = scalar_lea.vmem [#allocation3], 8
    %538 = vst.msk [vmem:[%s537] sm:$0xff] %vm322, %v535
    %s539 = scalar_lea.vmem [#allocation2], 16
    %v540 = vld [vmem:[%s539] sm:$0xff]
    %v541 = vld [vmem:[%s5] sm:$0xff]
    %v542 = vld [vmem:[%s5 + $0x8] sm:$0xff]
    %v543 = vld [vmem:[%s5 + $0x10] sm:$0xff]
    %v544 = vld [vmem:[%s5 + $0x18] sm:$0xff]
    %v545 = vsel %vm322, %v535, 0
    %547 = vmatprep.subr.mxu0 0.0
    %548 = vmatpush1.msra.mxu0 %v541
    %549 = vmatprep.subr.mxu0 0.0
    %550 = vmatpush1.msra.mxu0 %v542
    %551 = vmatprep.subr.mxu0 0.0
    %552 = vmatpush1.msra.mxu0 %v543
    %553 = vmatprep.subr.mxu0 0.0
    %554 = vmatpush1.msra.mxu0 %v544
    %555 = vmatprep.subr.mxu0 0.0
    %556 = vmatpush1.msra.mxu0 0.0
    %557 = vmatprep.subr.mxu0 0.0
    %558 = vmatpush1.msra.mxu0 0.0
    %559 = vmatprep.subr.mxu0 0.0
    %560 = vmatpush1.msra.mxu0 0.0
    %561 = vmatprep.subr.mxu0 0.0
    %562 = vmatpush1.msra.mxu0 0.0
    %563 = vmatprep.subr.mxu0 0.0
    %564 = vmatpush1.msra.mxu0 0.0
    %565 = vmatprep.subr.mxu0 0.0
    %566 = vmatpush1.msra.mxu0 0.0
    %567 = vmatprep.subr.mxu0 0.0
    %568 = vmatpush1.msra.mxu0 0.0
    %569 = vmatprep.subr.mxu0 0.0
    %570 = vmatpush1.msra.mxu0 0.0
    %571 = vmatprep.subr.mxu0 0.0
    %572 = vmatpush1.msra.mxu0 0.0
    %573 = vmatprep.subr.mxu0 0.0
    %574 = vmatpush1.msra.mxu0 0.0
    %575 = vmatprep.subr.mxu0 0.0
    %576 = vmatpush1.msra.mxu0 0.0
    %577 = vmatprep.subr.mxu0 0.0
    %578 = vmatpush1.msra.mxu0 0.0
    %579 = vmatprep.subr.mxu0 0.0
    %580 = vmatpush1.msra.mxu0 0.0
    %581 = vmatprep.subr.mxu0 0.0
    %582 = vmatpush1.msra.mxu0 0.0
    %583 = vmatprep.subr.mxu0 0.0
    %584 = vmatpush1.msra.mxu0 0.0
    %585 = vmatprep.subr.mxu0 0.0
    %586 = vmatpush1.msra.mxu0 0.0
    %587 = vmatprep.subr.mxu0 0.0
    %588 = vmatpush1.msra.mxu0 0.0
    %589 = vmatprep.subr.mxu0 0.0
    %590 = vmatpush1.msra.mxu0 0.0
    %591 = vmatprep.subr.mxu0 0.0
    %592 = vmatpush1.msra.mxu0 0.0
    %593 = vmatprep.subr.mxu0 0.0
    %594 = vmatpush1.msra.mxu0 0.0
    %595 = vmatprep.subr.mxu0 0.0
    %596 = vmatpush1.msra.mxu0 0.0
    %597 = vmatprep.subr.mxu0 0.0
    %598 = vmatpush1.msra.mxu0 0.0
    %599 = vmatprep.subr.mxu0 0.0
    %600 = vmatpush1.msra.mxu0 0.0
    %601 = vmatprep.subr.mxu0 0.0
    %602 = vmatpush1.msra.mxu0 0.0
    %603 = vmatprep.subr.mxu0 0.0
    %604 = vmatpush1.msra.mxu0 0.0
    %605 = vmatprep.subr.mxu0 0.0
    %606 = vmatpush1.msra.mxu0 0.0
    %607 = vmatprep.subr.mxu0 0.0
    %608 = vmatpush1.msra.mxu0 0.0
    %609 = vmatprep.subr.mxu0 0.0
    %610 = vmatpush1.msra.mxu0 0.0
    %611 = vmatprep.mubr.f32.mxu0 0.0
    %612 = vmatmul.mubr.f32.gmra.mrb[0].mxu0 %v545
    %v613 = vpop.f32.mrb[0].mxu0
    %v614 = vadd.f32 0.0, %v613
    %v615 = vpop.f32.mrb[0].mxu0
    %616 = vdwg.mxu0
    %v617 = vadd.f32 %v540, %v614
    %v618 = vxor.u32 %v617, 2147483648
    %v619 = vmul.f32 %v618, 1.442695
    %v620 = vpow.pop %v619
    %v621 = vadd.f32 %v620, 1.0
    %v622 = vrcp.pop %v621
    %v623 = vmul.f32 1.0, %v622
    %v624 = vtanh.pop %v617
    %v625 = vmul.f32 %v623, %v526
    %627 = vrot.lane.b32.xlu0 %v624, 64
    %v628 = vpop.permute.xlu0 %627
    %v630 = vmul.f32 %v623, %v628
    %632 = vrot.lane.b32.xlu0 %v630, 32
    %v633 = vpop.permute.xlu0 %632
    %v635 = vadd.f32 %v625, %v633
    %v636 = vtanh.pop %v635
    %638 = vrot.lane.b32.xlu0 %v636, 64
    %v639 = vpop.permute.xlu0 %638
    %v641 = vmul.f32 %v623, %v639
    %643 = vrot.lane.b32.xlu0 %v641, 32
    %v644 = vpop.permute.xlu0 %643
    %s646 = scalar_lea.vmem [#allocation3], 16
    %647 = vst.msk [vmem:[%s646] sm:$0xff] %vm322, %v644
    %s648 = scalar_lea.vmem [#allocation2], 24
    %v649 = vld [vmem:[%s648] sm:$0xff]
    %v650 = vld [vmem:[%s5] sm:$0xff]
    %v651 = vld [vmem:[%s5 + $0x8] sm:$0xff]
    %v652 = vld [vmem:[%s5 + $0x10] sm:$0xff]
    %v653 = vld [vmem:[%s5 + $0x18] sm:$0xff]
    %v654 = vsel %vm322, %v644, 0
    %656 = vmatprep.subr.mxu0 0.0
    %657 = vmatpush1.msra.mxu0 %v650
    %658 = vmatprep.subr.mxu0 0.0
    %659 = vmatpush1.msra.mxu0 %v651
    %660 = vmatprep.subr.mxu0 0.0
    %661 = vmatpush1.msra.mxu0 %v652
    %662 = vmatprep.subr.mxu0 0.0
    %663 = vmatpush1.msra.mxu0 %v653
    %664 = vmatprep.subr.mxu0 0.0
    %665 = vmatpush1.msra.mxu0 0.0
    %666 = vmatprep.subr.mxu0 0.0
    %667 = vmatpush1.msra.mxu0 0.0
    %668 = vmatprep.subr.mxu0 0.0
    %669 = vmatpush1.msra.mxu0 0.0
    %670 = vmatprep.subr.mxu0 0.0
    %671 = vmatpush1.msra.mxu0 0.0
    %672 = vmatprep.subr.mxu0 0.0
    %673 = vmatpush1.msra.mxu0 0.0
    %674 = vmatprep.subr.mxu0 0.0
    %675 = vmatpush1.msra.mxu0 0.0
    %676 = vmatprep.subr.mxu0 0.0
    %677 = vmatpush1.msra.mxu0 0.0
    %678 = vmatprep.subr.mxu0 0.0
    %679 = vmatpush1.msra.mxu0 0.0
    %680 = vmatprep.subr.mxu0 0.0
    %681 = vmatpush1.msra.mxu0 0.0
    %682 = vmatprep.subr.mxu0 0.0
    %683 = vmatpush1.msra.mxu0 0.0
    %684 = vmatprep.subr.mxu0 0.0
    %685 = vmatpush1.msra.mxu0 0.0
    %686 = vmatprep.subr.mxu0 0.0
    %687 = vmatpush1.msra.mxu0 0.0
    %688 = vmatprep.subr.mxu0 0.0
    %689 = vmatpush1.msra.mxu0 0.0
    %690 = vmatprep.subr.mxu0 0.0
    %691 = vmatpush1.msra.mxu0 0.0
    %692 = vmatprep.subr.mxu0 0.0
    %693 = vmatpush1.msra.mxu0 0.0
    %694 = vmatprep.subr.mxu0 0.0
    %695 = vmatpush1.msra.mxu0 0.0
    %696 = vmatprep.subr.mxu0 0.0
    %697 = vmatpush1.msra.mxu0 0.0
    %698 = vmatprep.subr.mxu0 0.0
    %699 = vmatpush1.msra.mxu0 0.0
    %700 = vmatprep.subr.mxu0 0.0
    %701 = vmatpush1.msra.mxu0 0.0
    %702 = vmatprep.subr.mxu0 0.0
    %703 = vmatpush1.msra.mxu0 0.0
    %704 = vmatprep.subr.mxu0 0.0
    %705 = vmatpush1.msra.mxu0 0.0
    %706 = vmatprep.subr.mxu0 0.0
    %707 = vmatpush1.msra.mxu0 0.0
    %708 = vmatprep.subr.mxu0 0.0
    %709 = vmatpush1.msra.mxu0 0.0
    %710 = vmatprep.subr.mxu0 0.0
    %711 = vmatpush1.msra.mxu0 0.0
    %712 = vmatprep.subr.mxu0 0.0
    %713 = vmatpush1.msra.mxu0 0.0
    %714 = vmatprep.subr.mxu0 0.0
    %715 = vmatpush1.msra.mxu0 0.0
    %716 = vmatprep.subr.mxu0 0.0
    %717 = vmatpush1.msra.mxu0 0.0
    %718 = vmatprep.subr.mxu0 0.0
    %719 = vmatpush1.msra.mxu0 0.0
    %720 = vmatprep.mubr.f32.mxu0 0.0
    %721 = vmatmul.mubr.f32.gmra.mrb[0].mxu0 %v654
    %v722 = vpop.f32.mrb[0].mxu0
    %v723 = vadd.f32 0.0, %v722
    %v724 = vpop.f32.mrb[0].mxu0
    %725 = vdwg.mxu0
    %v726 = vadd.f32 %v649, %v723
    %v727 = vxor.u32 %v726, 2147483648
    %v728 = vmul.f32 %v727, 1.442695
    %v729 = vpow.pop %v728
    %v730 = vadd.f32 %v729, 1.0
    %v731 = vrcp.pop %v730
    %v732 = vmul.f32 1.0, %v731
    %v733 = vtanh.pop %v726
    %v734 = vmul.f32 %v732, %v635
    %736 = vrot.lane.b32.xlu0 %v733, 64
    %v737 = vpop.permute.xlu0 %736
    %v739 = vmul.f32 %v732, %v737
    %741 = vrot.lane.b32.xlu0 %v739, 32
    %v742 = vpop.permute.xlu0 %741
    %v744 = vadd.f32 %v734, %v742
    %v745 = vtanh.pop %v744
    %747 = vrot.lane.b32.xlu0 %v745, 64
    %v748 = vpop.permute.xlu0 %747
    %v750 = vmul.f32 %v732, %v748
    %752 = vrot.lane.b32.xlu0 %v750, 32
    %v753 = vpop.permute.xlu0 %752
    %s755 = scalar_lea.vmem [#allocation3], 24
    %756 = vst.msk [vmem:[%s755] sm:$0xff] %vm322, %v753
    %s757 = scalar_lea.vmem [#allocation2], 32
    %v758 = vld [vmem:[%s757] sm:$0xff]
    %v759 = vld [vmem:[%s5] sm:$0xff]
    %v760 = vld [vmem:[%s5 + $0x8] sm:$0xff]
    %v761 = vld [vmem:[%s5 + $0x10] sm:$0xff]
    %v762 = vld [vmem:[%s5 + $0x18] sm:$0xff]
    %v763 = vsel %vm322, %v753, 0
    %765 = vmatprep.subr.mxu0 0.0
    %766 = vmatpush1.msra.mxu0 %v759
    %767 = vmatprep.subr.mxu0 0.0
    %768 = vmatpush1.msra.mxu0 %v760
    %769 = vmatprep.subr.mxu0 0.0
    %770 = vmatpush1.msra.mxu0 %v761
    %771 = vmatprep.subr.mxu0 0.0
    %772 = vmatpush1.msra.mxu0 %v762
    %773 = vmatprep.subr.mxu0 0.0
    %774 = vmatpush1.msra.mxu0 0.0
    %775 = vmatprep.subr.mxu0 0.0
    %776 = vmatpush1.msra.mxu0 0.0
    %777 = vmatprep.subr.mxu0 0.0
    %778 = vmatpush1.msra.mxu0 0.0
    %779 = vmatprep.subr.mxu0 0.0
    %780 = vmatpush1.msra.mxu0 0.0
    %781 = vmatprep.subr.mxu0 0.0
    %782 = vmatpush1.msra.mxu0 0.0
    %783 = vmatprep.subr.mxu0 0.0
    %784 = vmatpush1.msra.mxu0 0.0
    %785 = vmatprep.subr.mxu0 0.0
    %786 = vmatpush1.msra.mxu0 0.0
    %787 = vmatprep.subr.mxu0 0.0
    %788 = vmatpush1.msra.mxu0 0.0
    %789 = vmatprep.subr.mxu0 0.0
    %790 = vmatpush1.msra.mxu0 0.0
    %791 = vmatprep.subr.mxu0 0.0
    %792 = vmatpush1.msra.mxu0 0.0
    %793 = vmatprep.subr.mxu0 0.0
    %794 = vmatpush1.msra.mxu0 0.0
    %795 = vmatprep.subr.mxu0 0.0
    %796 = vmatpush1.msra.mxu0 0.0
    %797 = vmatprep.subr.mxu0 0.0
    %798 = vmatpush1.msra.mxu0 0.0
    %799 = vmatprep.subr.mxu0 0.0
    %800 = vmatpush1.msra.mxu0 0.0
    %801 = vmatprep.subr.mxu0 0.0
    %802 = vmatpush1.msra.mxu0 0.0
    %803 = vmatprep.subr.mxu0 0.0
    %804 = vmatpush1.msra.mxu0 0.0
    %805 = vmatprep.subr.mxu0 0.0
    %806 = vmatpush1.msra.mxu0 0.0
    %807 = vmatprep.subr.mxu0 0.0
    %808 = vmatpush1.msra.mxu0 0.0
    %809 = vmatprep.subr.mxu0 0.0
    %810 = vmatpush1.msra.mxu0 0.0
    %811 = vmatprep.subr.mxu0 0.0
    %812 = vmatpush1.msra.mxu0 0.0
    %813 = vmatprep.subr.mxu0 0.0
    %814 = vmatpush1.msra.mxu0 0.0
    %815 = vmatprep.subr.mxu0 0.0
    %816 = vmatpush1.msra.mxu0 0.0
    %817 = vmatprep.subr.mxu0 0.0
    %818 = vmatpush1.msra.mxu0 0.0
    %819 = vmatprep.subr.mxu0 0.0
    %820 = vmatpush1.msra.mxu0 0.0
    %821 = vmatprep.subr.mxu0 0.0
    %822 = vmatpush1.msra.mxu0 0.0
    %823 = vmatprep.subr.mxu0 0.0
    %824 = vmatpush1.msra.mxu0 0.0
    %825 = vmatprep.subr.mxu0 0.0
    %826 = vmatpush1.msra.mxu0 0.0
    %827 = vmatprep.subr.mxu0 0.0
    %828 = vmatpush1.msra.mxu0 0.0
    %829 = vmatprep.mubr.f32.mxu0 0.0
    %830 = vmatmul.mubr.f32.gmra.mrb[0].mxu0 %v763
    %v831 = vpop.f32.mrb[0].mxu0
    %v832 = vadd.f32 0.0, %v831
    %v833 = vpop.f32.mrb[0].mxu0
    %834 = vdwg.mxu0
    %v835 = vadd.f32 %v758, %v832
    %v836 = vxor.u32 %v835, 2147483648
    %v837 = vmul.f32 %v836, 1.442695
    %v838 = vpow.pop %v837
    %v839 = vadd.f32 %v838, 1.0
    %v840 = vrcp.pop %v839
    %v841 = vmul.f32 1.0, %v840
    %v842 = vtanh.pop %v835
    %v843 = vmul.f32 %v841, %v744
    %845 = vrot.lane.b32.xlu0 %v842, 64
    %v846 = vpop.permute.xlu0 %845
    %v848 = vmul.f32 %v841, %v846
    %850 = vrot.lane.b32.xlu0 %v848, 32
    %v851 = vpop.permute.xlu0 %850
    %v853 = vadd.f32 %v843, %v851
    %v854 = vtanh.pop %v853
    %856 = vrot.lane.b32.xlu0 %v854, 64
    %v857 = vpop.permute.xlu0 %856
    %v859 = vmul.f32 %v841, %v857
    %861 = vrot.lane.b32.xlu0 %v859, 32
    %v862 = vpop.permute.xlu0 %861
    %s864 = scalar_lea.vmem [#allocation3], 32
    %865 = vst.msk [vmem:[%s864] sm:$0xff] %vm322, %v862
    %s866 = scalar_lea.vmem [#allocation2], 40
    %v867 = vld [vmem:[%s866] sm:$0xff]
    %v868 = vld [vmem:[%s5] sm:$0xff]
    %v869 = vld [vmem:[%s5 + $0x8] sm:$0xff]
    %v870 = vld [vmem:[%s5 + $0x10] sm:$0xff]
    %v871 = vld [vmem:[%s5 + $0x18] sm:$0xff]
    %v872 = vsel %vm322, %v862, 0
    %874 = vmatprep.subr.mxu0 0.0
    %875 = vmatpush1.msra.mxu0 %v868
    %876 = vmatprep.subr.mxu0 0.0
    %877 = vmatpush1.msra.mxu0 %v869
    %878 = vmatprep.subr.mxu0 0.0
    %879 = vmatpush1.msra.mxu0 %v870
    %880 = vmatprep.subr.mxu0 0.0
    %881 = vmatpush1.msra.mxu0 %v871
    %882 = vmatprep.subr.mxu0 0.0
    %883 = vmatpush1.msra.mxu0 0.0
    %884 = vmatprep.subr.mxu0 0.0
    %885 = vmatpush1.msra.mxu0 0.0
    %886 = vmatprep.subr.mxu0 0.0
    %887 = vmatpush1.msra.mxu0 0.0
    %888 = vmatprep.subr.mxu0 0.0
    %889 = vmatpush1.msra.mxu0 0.0
    %890 = vmatprep.subr.mxu0 0.0
    %891 = vmatpush1.msra.mxu0 0.0
    %892 = vmatprep.subr.mxu0 0.0
    %893 = vmatpush1.msra.mxu0 0.0
    %894 = vmatprep.subr.mxu0 0.0
    %895 = vmatpush1.msra.mxu0 0.0
    %896 = vmatprep.subr.mxu0 0.0
    %897 = vmatpush1.msra.mxu0 0.0
    %898 = vmatprep.subr.mxu0 0.0
    %899 = vmatpush1.msra.mxu0 0.0
    %900 = vmatprep.subr.mxu0 0.0
    %901 = vmatpush1.msra.mxu0 0.0
    %902 = vmatprep.subr.mxu0 0.0
    %903 = vmatpush1.msra.mxu0 0.0
    %904 = vmatprep.subr.mxu0 0.0
    %905 = vmatpush1.msra.mxu0 0.0
    %906 = vmatprep.subr.mxu0 0.0
    %907 = vmatpush1.msra.mxu0 0.0
    %908 = vmatprep.subr.mxu0 0.0
    %909 = vmatpush1.msra.mxu0 0.0
    %910 = vmatprep.subr.mxu0 0.0
    %911 = vmatpush1.msra.mxu0 0.0
    %912 = vmatprep.subr.mxu0 0.0
    %913 = vmatpush1.msra.mxu0 0.0
    %914 = vmatprep.subr.mxu0 0.0
    %915 = vmatpush1.msra.mxu0 0.0
    %916 = vmatprep.subr.mxu0 0.0
    %917 = vmatpush1.msra.mxu0 0.0
    %918 = vmatprep.subr.mxu0 0.0
    %919 = vmatpush1.msra.mxu0 0.0
    %920 = vmatprep.subr.mxu0 0.0
    %921 = vmatpush1.msra.mxu0 0.0
    %922 = vmatprep.subr.mxu0 0.0
    %923 = vmatpush1.msra.mxu0 0.0
    %924 = vmatprep.subr.mxu0 0.0
    %925 = vmatpush1.msra.mxu0 0.0
    %926 = vmatprep.subr.mxu0 0.0
    %927 = vmatpush1.msra.mxu0 0.0
    %928 = vmatprep.subr.mxu0 0.0
    %929 = vmatpush1.msra.mxu0 0.0
    %930 = vmatprep.subr.mxu0 0.0
    %931 = vmatpush1.msra.mxu0 0.0
    %932 = vmatprep.subr.mxu0 0.0
    %933 = vmatpush1.msra.mxu0 0.0
    %934 = vmatprep.subr.mxu0 0.0
    %935 = vmatpush1.msra.mxu0 0.0
    %936 = vmatprep.subr.mxu0 0.0
    %937 = vmatpush1.msra.mxu0 0.0
    %938 = vmatprep.mubr.f32.mxu0 0.0
    %939 = vmatmul.mubr.f32.gmra.mrb[0].mxu0 %v872
    %v940 = vpop.f32.mrb[0].mxu0
    %v941 = vadd.f32 0.0, %v940
    %v942 = vpop.f32.mrb[0].mxu0
    %943 = vdwg.mxu0
    %v944 = vadd.f32 %v867, %v941
    %v945 = vxor.u32 %v944, 2147483648
    %v946 = vmul.f32 %v945, 1.442695
    %v947 = vpow.pop %v946
    %v948 = vadd.f32 %v947, 1.0
    %v949 = vrcp.pop %v948
    %v950 = vmul.f32 1.0, %v949
    %v951 = vtanh.pop %v944
    %v952 = vmul.f32 %v950, %v853
    %954 = vrot.lane.b32.xlu0 %v951, 64
    %v955 = vpop.permute.xlu0 %954
    %v957 = vmul.f32 %v950, %v955
    %959 = vrot.lane.b32.xlu0 %v957, 32
    %v960 = vpop.permute.xlu0 %959
    %v962 = vadd.f32 %v952, %v960
    %v963 = vtanh.pop %v962
    %965 = vrot.lane.b32.xlu0 %v963, 64
    %v966 = vpop.permute.xlu0 %965
    %v968 = vmul.f32 %v950, %v966
    %970 = vrot.lane.b32.xlu0 %v968, 32
    %v971 = vpop.permute.xlu0 %970
    %s973 = scalar_lea.vmem [#allocation3], 40
    %974 = vst.msk [vmem:[%s973] sm:$0xff] %vm322, %v971
    %s975 = scalar_lea.vmem [#allocation2], 48
    %v976 = vld [vmem:[%s975] sm:$0xff]
    %v977 = vld [vmem:[%s5] sm:$0xff]
    %v978 = vld [vmem:[%s5 + $0x8] sm:$0xff]
    %v979 = vld [vmem:[%s5 + $0x10] sm:$0xff]
    %v980 = vld [vmem:[%s5 + $0x18] sm:$0xff]
    %v981 = vsel %vm322, %v971, 0
    %983 = vmatprep.subr.mxu0 0.0
    %984 = vmatpush1.msra.mxu0 %v977
    %985 = vmatprep.subr.mxu0 0.0
    %986 = vmatpush1.msra.mxu0 %v978
    %987 = vmatprep.subr.mxu0 0.0
    %988 = vmatpush1.msra.mxu0 %v979
    %989 = vmatprep.subr.mxu0 0.0
    %990 = vmatpush1.msra.mxu0 %v980
    %991 = vmatprep.subr.mxu0 0.0
    %992 = vmatpush1.msra.mxu0 0.0
    %993 = vmatprep.subr.mxu0 0.0
    %994 = vmatpush1.msra.mxu0 0.0
    %995 = vmatprep.subr.mxu0 0.0
    %996 = vmatpush1.msra.mxu0 0.0
    %997 = vmatprep.subr.mxu0 0.0
    %998 = vmatpush1.msra.mxu0 0.0
    %999 = vmatprep.subr.mxu0 0.0
    %1000 = vmatpush1.msra.mxu0 0.0
    %1001 = vmatprep.subr.mxu0 0.0
    %1002 = vmatpush1.msra.mxu0 0.0
    %1003 = vmatprep.subr.mxu0 0.0
    %1004 = vmatpush1.msra.mxu0 0.0
    %1005 = vmatprep.subr.mxu0 0.0
    %1006 = vmatpush1.msra.mxu0 0.0
    %1007 = vmatprep.subr.mxu0 0.0
    %1008 = vmatpush1.msra.mxu0 0.0
    %1009 = vmatprep.subr.mxu0 0.0
    %1010 = vmatpush1.msra.mxu0 0.0
    %1011 = vmatprep.subr.mxu0 0.0
    %1012 = vmatpush1.msra.mxu0 0.0
    %1013 = vmatprep.subr.mxu0 0.0
    %1014 = vmatpush1.msra.mxu0 0.0
    %1015 = vmatprep.subr.mxu0 0.0
    %1016 = vmatpush1.msra.mxu0 0.0
    %1017 = vmatprep.subr.mxu0 0.0
    %1018 = vmatpush1.msra.mxu0 0.0
    %1019 = vmatprep.subr.mxu0 0.0
    %1020 = vmatpush1.msra.mxu0 0.0
    %1021 = vmatprep.subr.mxu0 0.0
    %1022 = vmatpush1.msra.mxu0 0.0
    %1023 = vmatprep.subr.mxu0 0.0
    %1024 = vmatpush1.msra.mxu0 0.0
    %1025 = vmatprep.subr.mxu0 0.0
    %1026 = vmatpush1.msra.mxu0 0.0
    %1027 = vmatprep.subr.mxu0 0.0
    %1028 = vmatpush1.msra.mxu0 0.0
    %1029 = vmatprep.subr.mxu0 0.0
    %1030 = vmatpush1.msra.mxu0 0.0
    %1031 = vmatprep.subr.mxu0 0.0
    %1032 = vmatpush1.msra.mxu0 0.0
    %1033 = vmatprep.subr.mxu0 0.0
    %1034 = vmatpush1.msra.mxu0 0.0
    %1035 = vmatprep.subr.mxu0 0.0
    %1036 = vmatpush1.msra.mxu0 0.0
    %1037 = vmatprep.subr.mxu0 0.0
    %1038 = vmatpush1.msra.mxu0 0.0
    %1039 = vmatprep.subr.mxu0 0.0
    %1040 = vmatpush1.msra.mxu0 0.0
    %1041 = vmatprep.subr.mxu0 0.0
    %1042 = vmatpush1.msra.mxu0 0.0
    %1043 = vmatprep.subr.mxu0 0.0
    %1044 = vmatpush1.msra.mxu0 0.0
    %1045 = vmatprep.subr.mxu0 0.0
    %1046 = vmatpush1.msra.mxu0 0.0
    %1047 = vmatprep.mubr.f32.mxu0 0.0
    %1048 = vmatmul.mubr.f32.gmra.mrb[0].mxu0 %v981
    %v1049 = vpop.f32.mrb[0].mxu0
    %v1050 = vadd.f32 0.0, %v1049
    %v1051 = vpop.f32.mrb[0].mxu0
    %1052 = vdwg.mxu0
    %v1053 = vadd.f32 %v976, %v1050
    %v1054 = vxor.u32 %v1053, 2147483648
    %v1055 = vmul.f32 %v1054, 1.442695
    %v1056 = vpow.pop %v1055
    %v1057 = vadd.f32 %v1056, 1.0
    %v1058 = vrcp.pop %v1057
    %v1059 = vmul.f32 1.0, %v1058
    %v1060 = vtanh.pop %v1053
    %v1061 = vmul.f32 %v1059, %v962
    %1063 = vrot.lane.b32.xlu0 %v1060, 64
    %v1064 = vpop.permute.xlu0 %1063
    %v1066 = vmul.f32 %v1059, %v1064
    %1068 = vrot.lane.b32.xlu0 %v1066, 32
    %v1069 = vpop.permute.xlu0 %1068
    %v1071 = vadd.f32 %v1061, %v1069
    %v1072 = vtanh.pop %v1071
    %1074 = vrot.lane.b32.xlu0 %v1072, 64
    %v1075 = vpop.permute.xlu0 %1074
    %v1077 = vmul.f32 %v1059, %v1075
    %1079 = vrot.lane.b32.xlu0 %v1077, 32
    %v1080 = vpop.permute.xlu0 %1079
    %s1082 = scalar_lea.vmem [#allocation3], 48
    %1083 = vst.msk [vmem:[%s1082] sm:$0xff] %vm322, %v1080
    %s1084 = scalar_lea.vmem [#allocation2], 56
    %v1085 = vld [vmem:[%s1084] sm:$0xff]
    %v1086 = vld [vmem:[%s5] sm:$0xff]
    %v1087 = vld [vmem:[%s5 + $0x8] sm:$0xff]
    %v1088 = vld [vmem:[%s5 + $0x10] sm:$0xff]
    %v1089 = vld [vmem:[%s5 + $0x18] sm:$0xff]
    %v1090 = vsel %vm322, %v1080, 0
    %1092 = vmatprep.subr.mxu0 0.0
    %1093 = vmatpush1.msra.mxu0 %v1086
    %1094 = vmatprep.subr.mxu0 0.0
    %1095 = vmatpush1.msra.mxu0 %v1087
    %1096 = vmatprep.subr.mxu0 0.0
    %1097 = vmatpush1.msra.mxu0 %v1088
    %1098 = vmatprep.subr.mxu0 0.0
    %1099 = vmatpush1.msra.mxu0 %v1089
    %1100 = vmatprep.subr.mxu0 0.0
    %1101 = vmatpush1.msra.mxu0 0.0
    %1102 = vmatprep.subr.mxu0 0.0
    %1103 = vmatpush1.msra.mxu0 0.0
    %1104 = vmatprep.subr.mxu0 0.0
    %1105 = vmatpush1.msra.mxu0 0.0
    %1106 = vmatprep.subr.mxu0 0.0
    %1107 = vmatpush1.msra.mxu0 0.0
    %1108 = vmatprep.subr.mxu0 0.0
    %1109 = vmatpush1.msra.mxu0 0.0
    %1110 = vmatprep.subr.mxu0 0.0
    %1111 = vmatpush1.msra.mxu0 0.0
    %1112 = vmatprep.subr.mxu0 0.0
    %1113 = vmatpush1.msra.mxu0 0.0
    %1114 = vmatprep.subr.mxu0 0.0
    %1115 = vmatpush1.msra.mxu0 0.0
    %1116 = vmatprep.subr.mxu0 0.0
    %1117 = vmatpush1.msra.mxu0 0.0
    %1118 = vmatprep.subr.mxu0 0.0
    %1119 = vmatpush1.msra.mxu0 0.0
    %1120 = vmatprep.subr.mxu0 0.0
    %1121 = vmatpush1.msra.mxu0 0.0
    %1122 = vmatprep.subr.mxu0 0.0
    %1123 = vmatpush1.msra.mxu0 0.0
    %1124 = vmatprep.subr.mxu0 0.0
    %1125 = vmatpush1.msra.mxu0 0.0
    %1126 = vmatprep.subr.mxu0 0.0
    %1127 = vmatpush1.msra.mxu0 0.0
    %1128 = vmatprep.subr.mxu0 0.0
    %1129 = vmatpush1.msra.mxu0 0.0
    %1130 = vmatprep.subr.mxu0 0.0
    %1131 = vmatpush1.msra.mxu0 0.0
    %1132 = vmatprep.subr.mxu0 0.0
    %1133 = vmatpush1.msra.mxu0 0.0
    %1134 = vmatprep.subr.mxu0 0.0
    %1135 = vmatpush1.msra.mxu0 0.0
    %1136 = vmatprep.subr.mxu0 0.0
    %1137 = vmatpush1.msra.mxu0 0.0
    %1138 = vmatprep.subr.mxu0 0.0
    %1139 = vmatpush1.msra.mxu0 0.0
    %1140 = vmatprep.subr.mxu0 0.0
    %1141 = vmatpush1.msra.mxu0 0.0
    %1142 = vmatprep.subr.mxu0 0.0
    %1143 = vmatpush1.msra.mxu0 0.0
    %1144 = vmatprep.subr.mxu0 0.0
    %1145 = vmatpush1.msra.mxu0 0.0
    %1146 = vmatprep.subr.mxu0 0.0
    %1147 = vmatpush1.msra.mxu0 0.0
    %1148 = vmatprep.subr.mxu0 0.0
    %1149 = vmatpush1.msra.mxu0 0.0
    %1150 = vmatprep.subr.mxu0 0.0
    %1151 = vmatpush1.msra.mxu0 0.0
    %1152 = vmatprep.subr.mxu0 0.0
    %1153 = vmatpush1.msra.mxu0 0.0
    %1154 = vmatprep.subr.mxu0 0.0
    %1155 = vmatpush1.msra.mxu0 0.0
    %1156 = vmatprep.mubr.f32.mxu0 0.0
    %1157 = vmatmul.mubr.f32.gmra.mrb[0].mxu0 %v1090
    %v1158 = vpop.f32.mrb[0].mxu0
    %v1159 = vadd.f32 0.0, %v1158
    %v1160 = vpop.f32.mrb[0].mxu0
    %1161 = vdwg.mxu0
    %v1162 = vadd.f32 %v1085, %v1159
    %v1163 = vxor.u32 %v1162, 2147483648
    %v1164 = vmul.f32 %v1163, 1.442695
    %v1165 = vpow.pop %v1164
    %v1166 = vadd.f32 %v1165, 1.0
    %v1167 = vrcp.pop %v1166
    %v1168 = vmul.f32 1.0, %v1167
    %v1169 = vtanh.pop %v1162
    %v1170 = vmul.f32 %v1168, %v1071
    %1172 = vrot.lane.b32.xlu0 %v1169, 64
    %v1173 = vpop.permute.xlu0 %1172
    %v1175 = vmul.f32 %v1168, %v1173
    %1177 = vrot.lane.b32.xlu0 %v1175, 32
    %v1178 = vpop.permute.xlu0 %1177
    %v1180 = vadd.f32 %v1170, %v1178
    %v1181 = vtanh.pop %v1180
    %1183 = vrot.lane.b32.xlu0 %v1181, 64
    %v1184 = vpop.permute.xlu0 %1183
    %v1186 = vmul.f32 %v1168, %v1184
    %1188 = vrot.lane.b32.xlu0 %v1186, 32
    %v1189 = vpop.permute.xlu0 %1188
    %s1191 = scalar_lea.vmem [#allocation3], 56
    %1192 = vst.msk [vmem:[%s1191] sm:$0xff] %vm322, %v1189
    %1193 = vst.msk [vmem:[#allocation10] sm:$0xff] %vm322, %v1189
    %1195 = vrot.lane.b32.xlu0 %v1180, 96
    %v1196 = vpop.permute.xlu0 %1195
    %1198 = vst.msk [vmem:[#allocation12] sm:$0xff] %vm322, %v1196
    %v1199 = vld [vmem:[#allocation3] sm:$0xff]
    %v1200 = vld [vmem:[#allocation3 + $0x8] sm:$0xff]
    %v1201 = vld [vmem:[#allocation3 + $0x10] sm:$0xff]
    %v1202 = vld [vmem:[#allocation3 + $0x18] sm:$0xff]
    %v1203 = vld [vmem:[#allocation3 + $0x20] sm:$0xff]
    %v1204 = vld [vmem:[#allocation3 + $0x28] sm:$0xff]
    %v1205 = vld [vmem:[#allocation3 + $0x30] sm:$0xff]
    %v1206 = vld [vmem:[#allocation3 + $0x38] sm:$0xff]
    %v1207 = vld [vmem:[%s7] sm:$0xff]
    %v1208 = vld [vmem:[%s7 + $0x8] sm:$0xff]
    %v1209 = vld [vmem:[%s7 + $0x10] sm:$0xff]
    %v1210 = vld [vmem:[%s7 + $0x18] sm:$0xff]
    %v1211 = vld [vmem:[%s8] sm:$0x1]
    %v1213 = vlaneseq
    %v1214 = vshrl.u32 %v1213, 7
    %v1215 = vsub.s32 0, %v1214
    %v1216 = vrot.slane %v1211, %v1215
    %v1219 = vsel %vm322, %v1199, 0
    %v1222 = vsel %vm322, %v1200, 0
    %v1225 = vsel %vm322, %v1201, 0
    %v1228 = vsel %vm322, %v1202, 0
    %v1231 = vsel %vm322, %v1203, 0
    %v1234 = vsel %vm322, %v1204, 0
    %v1237 = vsel %vm322, %v1205, 0
    %v1240 = vsel %vm322, %v1206, 0
    %1242 = vmatprep.subr.mxu0 0.0
    %1243 = vmatpush1.msra.mxu0 %v1207
    %1244 = vmatprep.subr.mxu0 0.0
    %1245 = vmatpush1.msra.mxu0 %v1208
    %1246 = vmatprep.subr.mxu0 0.0
    %1247 = vmatpush1.msra.mxu0 %v1209
    %1248 = vmatprep.subr.mxu0 0.0
    %1249 = vmatpush1.msra.mxu0 %v1210
    %1250 = vmatprep.subr.mxu0 0.0
    %1251 = vmatpush1.msra.mxu0 0.0
    %1252 = vmatprep.subr.mxu0 0.0
    %1253 = vmatpush1.msra.mxu0 0.0
    %1254 = vmatprep.subr.mxu0 0.0
    %1255 = vmatpush1.msra.mxu0 0.0
    %1256 = vmatprep.subr.mxu0 0.0
    %1257 = vmatpush1.msra.mxu0 0.0
    %1258 = vmatprep.subr.mxu0 0.0
    %1259 = vmatpush1.msra.mxu0 0.0
    %1260 = vmatprep.subr.mxu0 0.0
    %1261 = vmatpush1.msra.mxu0 0.0
    %1262 = vmatprep.subr.mxu0 0.0
    %1263 = vmatpush1.msra.mxu0 0.0
    %1264 = vmatprep.subr.mxu0 0.0
    %1265 = vmatpush1.msra.mxu0 0.0
    %1266 = vmatprep.subr.mxu0 0.0
    %1267 = vmatpush1.msra.mxu0 0.0
    %1268 = vmatprep.subr.mxu0 0.0
    %1269 = vmatpush1.msra.mxu0 0.0
    %1270 = vmatprep.subr.mxu0 0.0
    %1271 = vmatpush1.msra.mxu0 0.0
    %1272 = vmatprep.subr.mxu0 0.0
    %1273 = vmatpush1.msra.mxu0 0.0
    %1274 = vmatprep.subr.mxu0 0.0
    %1275 = vmatpush1.msra.mxu0 0.0
    %1276 = vmatprep.subr.mxu0 0.0
    %1277 = vmatpush1.msra.mxu0 0.0
    %1278 = vmatprep.subr.mxu0 0.0
    %1279 = vmatpush1.msra.mxu0 0.0
    %1280 = vmatprep.subr.mxu0 0.0
    %1281 = vmatpush1.msra.mxu0 0.0
    %1282 = vmatprep.subr.mxu0 0.0
    %1283 = vmatpush1.msra.mxu0 0.0
    %1284 = vmatprep.subr.mxu0 0.0
    %1285 = vmatpush1.msra.mxu0 0.0
    %1286 = vmatprep.subr.mxu0 0.0
    %1287 = vmatpush1.msra.mxu0 0.0
    %1288 = vmatprep.subr.mxu0 0.0
    %1289 = vmatpush1.msra.mxu0 0.0
    %1290 = vmatprep.subr.mxu0 0.0
    %1291 = vmatpush1.msra.mxu0 0.0
    %1292 = vmatprep.subr.mxu0 0.0
    %1293 = vmatpush1.msra.mxu0 0.0
    %1294 = vmatprep.subr.mxu0 0.0
    %1295 = vmatpush1.msra.mxu0 0.0
    %1296 = vmatprep.subr.mxu0 0.0
    %1297 = vmatpush1.msra.mxu0 0.0
    %1298 = vmatprep.subr.mxu0 0.0
    %1299 = vmatpush1.msra.mxu0 0.0
    %1300 = vmatprep.subr.mxu0 0.0
    %1301 = vmatpush1.msra.mxu0 0.0
    %1302 = vmatprep.subr.mxu0 0.0
    %1303 = vmatpush1.msra.mxu0 0.0
    %1304 = vmatprep.subr.mxu0 0.0
    %1305 = vmatpush1.msra.mxu0 0.0
    %1306 = vmatprep.mubr.f32.mxu0 0.0
    %1307 = vmatmul.mubr.f32.gmra.mrb[0].mxu0 %v1219
    %v1308 = vpop.f32.mrb[0].mxu0
    %v1309 = vadd.f32 %v1216, %v1308
    %v1310 = vpop.f32.mrb[0].mxu0
    %1311 = vmatprep.mubr.f32.mxu0 0.0
    %1312 = vmatmul.mubr.f32.gmra.mrb[0].mxu0 %v1222
    %v1313 = vpop.f32.mrb[0].mxu0
    %v1314 = vadd.f32 %v1216, %v1313
    %v1315 = vpop.f32.mrb[0].mxu0
    %1316 = vmatprep.mubr.f32.mxu0 0.0
    %1317 = vmatmul.mubr.f32.gmra.mrb[0].mxu0 %v1225
    %v1318 = vpop.f32.mrb[0].mxu0
    %v1319 = vadd.f32 %v1216, %v1318
    %v1320 = vpop.f32.mrb[0].mxu0
    %1321 = vmatprep.mubr.f32.mxu0 0.0
    %1322 = vmatmul.mubr.f32.gmra.mrb[0].mxu0 %v1228
    %v1323 = vpop.f32.mrb[0].mxu0
    %v1324 = vadd.f32 %v1216, %v1323
    %v1325 = vpop.f32.mrb[0].mxu0
    %1326 = vmatprep.mubr.f32.mxu0 0.0
    %1327 = vmatmul.mubr.f32.gmra.mrb[0].mxu0 %v1231
    %v1328 = vpop.f32.mrb[0].mxu0
    %v1329 = vadd.f32 %v1216, %v1328
    %v1330 = vpop.f32.mrb[0].mxu0
    %1331 = vmatprep.mubr.f32.mxu0 0.0
    %1332 = vmatmul.mubr.f32.gmra.mrb[0].mxu0 %v1234
    %v1333 = vpop.f32.mrb[0].mxu0
    %v1334 = vadd.f32 %v1216, %v1333
    %v1335 = vpop.f32.mrb[0].mxu0
    %1336 = vmatprep.mubr.f32.mxu0 0.0
    %1337 = vmatmul.mubr.f32.gmra.mrb[0].mxu0 %v1237
    %v1338 = vpop.f32.mrb[0].mxu0
    %v1339 = vadd.f32 %v1216, %v1338
    %v1340 = vpop.f32.mrb[0].mxu0
    %1341 = vmatprep.mubr.f32.mxu0 0.0
    %1342 = vmatmul.mubr.f32.gmra.mrb[0].mxu0 %v1240
    %v1343 = vpop.f32.mrb[0].mxu0
    %v1344 = vadd.f32 %v1216, %v1343
    %v1345 = vpop.f32.mrb[0].mxu0
    %1346 = vdwg.mxu0
    %1347 = vst [vmem:[#allocation9] sm:$0xff] %v1309
    %1348 = vst [vmem:[#allocation9 + $0x8] sm:$0xff] %v1314
    %1349 = vst [vmem:[#allocation9 + $0x10] sm:$0xff] %v1319
    %1350 = vst [vmem:[#allocation9 + $0x18] sm:$0xff] %v1324
    %1351 = vst [vmem:[#allocation9 + $0x20] sm:$0xff] %v1329
    %1352 = vst [vmem:[#allocation9 + $0x28] sm:$0xff] %v1334
    %1353 = vst [vmem:[#allocation9 + $0x30] sm:$0xff] %v1339
    %1354 = vst [vmem:[#allocation9 + $0x38] sm:$0xff] %v1344
    // Predicated region
    $region50: #{tpu_custom_call.1} parent=1 // pred_check
      _
    $region51: #{tpu_custom_call.1} parent=1 // pred_check_branch
      %1356 = sbr.rel (0) target = $region53
    $region52: #{tpu_custom_call.1} parent=1 // pred_region
      %s1358 = ssub.s32 1024, 1024
      %1359 = vsyncadd [#allocation6], %s1358
      %s1360 = sshll.u32 [#allocation9], 4
      %s1361 = int_to_ptr.vmem [resolvable:$true] %s1360
      %1366 = dma.vmem_to_hbm [thread:$0]  %s1361, 1024, %s9, [#allocation6], 128, 128, 8
    $region53: #{tpu_custom_call.1} parent=1 // pred_fallthru
      _
    // Predicated region
    $region54: #{tpu_custom_call.1} parent=1 // pred_check
      _
    $region55: #{tpu_custom_call.1} parent=1 // pred_check_branch
      %1368 = sbr.rel (0) target = $region57
    $region56: #{tpu_custom_call.1} parent=1 // pred_region
      %s1370 = ssub.s32 128, 128
      %1371 = vsyncadd [#allocation11], %s1370
      %s1373 = sshll.u32 [#allocation10], 4
      %s1374 = int_to_ptr.vmem [resolvable:$true] %s1373
      %1376 = dma.vmem_to_hbm [thread:$0]  %s1374, 128, %s10, [#allocation11]
    $region57: #{tpu_custom_call.1} parent=1 // pred_fallthru
      _
    // Predicated region
    $region58: #{tpu_custom_call.1} parent=1 // pred_check
      _
    $region59: #{tpu_custom_call.1} parent=1 // pred_check_branch
      %1378 = sbr.rel (0) target = $region61
    $region60: #{tpu_custom_call.1} parent=1 // pred_region
      %s1380 = ssub.s32 128, 128
      %1381 = vsyncadd [#allocation11], %s1380
      %s1383 = sshll.u32 [#allocation12], 4
      %s1384 = int_to_ptr.vmem [resolvable:$true] %s1383
      %1386 = dma.vmem_to_hbm [thread:$0]  %s1384, 128, %s11, [#allocation11]
    $region61: #{tpu_custom_call.1} parent=1 // pred_fallthru
      _
    // Predicated region
    $region62: #{tpu_custom_call.1} parent=1 // pred_check
      _
    $region63: #{tpu_custom_call.1} parent=1 // pred_check_branch
      %1388 = sbr.rel (0) target = $region65
    $region64: #{tpu_custom_call.1} parent=1 // pred_region
      %1389 = dma.done [#allocation6], 1024
    $region65: #{tpu_custom_call.1} parent=1 // pred_fallthru
      _
    // Predicated region
    $region66: #{tpu_custom_call.1} parent=1 // pred_check
      _
    $region67: #{tpu_custom_call.1} parent=1 // pred_check_branch
      %1391 = sbr.rel (0) target = $region69
    $region68: #{tpu_custom_call.1} parent=1 // pred_region
      %1392 = dma.done [#allocation11], 128
    $region69: #{tpu_custom_call.1} parent=1 // pred_fallthru
      _
    // Predicated region
    $region70: #{tpu_custom_call.1} parent=1 // pred_check
      _
    $region71: #{tpu_custom_call.1} parent=1 // pred_check_branch
      %1394 = sbr.rel (0) target = $region73
    $region72: #{tpu_custom_call.1} parent=1 // pred_region
      %1395 = dma.done [#allocation11], 128
    $region73: #{tpu_custom_call.1} parent=1 // pred_fallthru
      _
    %1396 = vsyncpa [#allocation5], 1
    %1397 = vsyncpa [#allocation8], 1
    %1398 = vsyncpa [#allocation6], 1
    %1399 = vsyncpa [#allocation11], 1

</llo_original>
